<compile_context>
chip_gen: v7x
topology: tpu7x:2x2x1
jax: 0.10.0
libtpu: 0.0.40
codegen_flags: <defaults>
</compile_context>

<pallas_src>
import numpy as np
import jax
import jax.numpy as jnp
from jax.experimental import pallas as pl
from jax.experimental.pallas import tpu as pltpu


def _erf_poly(x):
    # Abramowitz & Stegun 7.1.26 rational approximation, max abs error ~1.5e-7.
    # Uses only mul/add/div/exp/where so it lowers cleanly in Mosaic.
    p = 0.3275911
    a1, a2, a3, a4, a5 = (0.254829592, -0.284496736, 1.421413741,
                          -1.453152027, 1.061405429)
    ax = jnp.where(x >= 0.0, x, -x)
    t = 1.0 / (1.0 + p * ax)
    poly = t * (a1 + t * (a2 + t * (a3 + t * (a4 + t * a5))))
    y = 1.0 - poly * jnp.exp(-ax * ax)
    return jnp.where(x >= 0.0, y, -y)


def _gelu_kernel(x):
    # exact (erf-based) GELU -> matches nn.GELU() default
    return 0.5 * x * (1.0 + _erf_poly(x * 0.7071067811865476))


def _gelu_ref(x):
    return jax.nn.gelu(x, approximate=False)


def _round_up(a, b):
    return (a + b - 1) // b * b


def _make_kernel(L, P, PRED, TN):
    def kernel(zp_ref,
               w_e_ref, b_e_ref,
               w_lr_ref, b_lr_ref,
               w_dr_ref,
               w_dep_ref, b_d_ref, scale_d_ref, shift_d_ref,
               w_pt_ref, b_pt_ref,
               w_fc1_ref, b_fc1_ref,
               w_fc2_ref, b_fc2_ref,
               out_ref):
        f32 = jnp.float32
        bf16 = jnp.bfloat16

        # ---- embed: Linear(P -> DM) as one (L*TN, P) @ (P, DM) matmul ------
        zp = zp_ref[...].reshape(L * TN, P)                         # rows = l*TN + n
        z = jnp.dot(zp.astype(bf16), w_e_ref[...],
                    preferred_element_type=f32) + b_e_ref[...]      # (L*TN, DM) f32
        zb = z.astype(bf16)

        # ---- per-patch dense matmuls (static unroll over L patches) -------
        w_dr = w_dr_ref[...]                                        # hoisted load
        z_res = jnp.zeros((TN, PRED), dtype=f32)
        res_parts = []
        dep_parts = []
        for l in range(L):
            zl = zb[l * TN:(l + 1) * TN, :]                         # (TN, DM) bf16
            # lin_res: Linear(L*DM -> PRED)  ==  sum_l z_l @ w_lr[l]
            z_res = z_res + jnp.dot(zl, w_lr_ref[l],
                                    preferred_element_type=f32)
            # depth_res: Linear(DM -> P)
            res_parts.append(jnp.dot(zl, w_dr, preferred_element_type=f32))
            # depth_conv (grouped Conv1d) as a per-patch (DM, P) matrix
            dep_parts.append(jnp.dot(zl, w_dep_ref[l],
                                     preferred_element_type=f32))
        res = jnp.concatenate(res_parts, axis=1)                    # (TN, L*P)
        dep = jnp.concatenate(dep_parts, axis=1)                    # (TN, L*P)

        # ---- depth path: GELU -> BatchNorm(eval) -> + depth_res -----------
        # (depth_res bias b_dr is folded into shift_d in the wrapper)
        zd = (_gelu_kernel(dep + b_d_ref[...]) * scale_d_ref[...]
              + shift_d_ref[...] + res)

        # ---- point_conv (kernel=1) as one (L*P, L*P) block-matrix matmul --
        zpt = jnp.dot(zd.astype(bf16), w_pt_ref[...],
                      preferred_element_type=f32) + b_pt_ref[...]   # (TN, L*P)
        g = _gelu_kernel(zpt)       # point BatchNorm(eval) folded into fc1

        # ---- Mlp: Linear(L*P -> H) -> GELU -> Linear(H -> PRED) -----------
        h = _gelu_kernel(jnp.dot(g.astype(bf16), w_fc1_ref[...],
                                 preferred_element_type=f32) + b_fc1_ref[...])
        z_mlp = jnp.dot(h.astype(bf16), w_fc2_ref[...],
                        preferred_element_type=f32) + b_fc2_ref[...]

        out = z_res + b_lr_ref[...] + z_mlp                         # (TN, PRED)
        out_ref[...] = out.T                                        # lane-dense (PRED, TN)

    return kernel


def backbone_forward(x, params, *, seq_len, pred_len, patch_len, stride):
    B, S, D = x.shape
    P = patch_len
    L = (seq_len - patch_len) // stride + 1 + 1          # +1 from padding_patch='end'
    DM = P * P
    H = 2 * pred_len
    PRED = pred_len
    N = B * D
    f32, bf16 = jnp.float32, jnp.bfloat16

    # -------- patching glue (plain JAX, static strided slices -- no gather) ----
    xt = jnp.transpose(x, (0, 2, 1))                                     # (B, D, S)
    z = jnp.concatenate([xt, jnp.repeat(xt[..., -1:], stride, axis=-1)], axis=-1)
    if z.shape[-1] < patch_len:
        z = jnp.pad(z, ((0, 0), (0, 0), (0, patch_len - z.shape[-1])))
    patches = [z[..., l * stride: l * stride + P] for l in range(L)]     # static slices
    zp = jnp.stack(patches, axis=0).reshape(L, N, P).astype(f32)         # (L, N, P)

    # -------- block size over the sample axis (pad N to a multiple of TN) ------
    TN = min(256, _round_up(N, 8))
    N_pad = _round_up(N, TN)
    if N_pad != N:
        zp = jnp.pad(zp, ((0, 0), (0, N_pad - N), (0, 0)))

    # -------- weight preprocessing: bf16 matmul operands, f32 biases/affines ---
    w_e = params['w_e'].astype(bf16)                            # (P, DM)
    b_e = params['b_e'].astype(f32)                             # (1, DM)
    w_lr = params['w_lr'].astype(bf16)                          # (L, DM, PRED)
    b_lr = params['b_lr'].astype(f32)                           # (1, PRED)
    w_dr = params['w_dr'].astype(bf16)                          # (DM, P)

    # depthwise conv -> per-patch matrices: W_dep[l, d, t] = w_d[l, d % P] * [d // P == t]
    sel = jnp.asarray((np.arange(DM)[:, None] // P == np.arange(P)[None, :])
                      .astype(np.float32))                      # (DM, P)
    w_d_tiled = jnp.tile(params['w_d'], (1, P))                 # (L, DM)
    w_dep = (w_d_tiled[:, :, None] * sel[None, :, :]).astype(bf16)   # (L, DM, P)

    b_d_flat = jnp.repeat(params['b_d'].reshape(L), P).reshape(1, L * P).astype(f32)
    scale_d = jnp.repeat(params['bn_d_scale'].reshape(L), P).reshape(1, L * P).astype(f32)
    shift_d = (jnp.repeat(params['bn_d_shift'].reshape(L), P)
               + jnp.tile(params['b_dr'].reshape(P), L)).reshape(1, L * P).astype(f32)

    # point conv (kernel=1) -> block matrix: [c*P+t, o*P+t'] = w_p[o, c] * [t == t']
    eyeP = jnp.eye(P, dtype=f32)
    w_pt = (params['w_p'].T[:, None, :, None] * eyeP[None, :, None, :]
            ).reshape(L * P, L * P).astype(bf16)
    b_pt = jnp.repeat(params['b_p'].reshape(L), P).reshape(1, L * P).astype(f32)

    # fold eval-mode point BatchNorm into fc1
    w_fc1_flat = params['w_fc1'].reshape(L * P, H)
    scale_p = jnp.repeat(params['bn_p_scale'].reshape(L), P)             # (L*P,)
    shift_p = jnp.repeat(params['bn_p_shift'].reshape(L), P)             # (L*P,)
    w_fc1 = (w_fc1_flat * scale_p[:, None]).astype(bf16)                 # (L*P, H)
    b_fc1 = (params['b_fc1'] + shift_p[None, :] @ w_fc1_flat).astype(f32)
    w_fc2 = params['w_fc2'].astype(bf16)                                 # (H, PRED)
    b_fc2 = params['b_fc2'].astype(f32)                                  # (1, PRED)

    weight_list = [w_e, b_e, w_lr, b_lr, w_dr,
                   w_dep, b_d_flat, scale_d, shift_d,
                   w_pt, b_pt, w_fc1, b_fc1, w_fc2, b_fc2]

    def full_spec(shape):
        nd = len(shape)
        return pl.BlockSpec(shape, lambda n, _nd=nd: (0,) * _nd)

    kernel = _make_kernel(L, P, PRED, TN)

    out = pl.pallas_call(
        kernel,
        out_shape=jax.ShapeDtypeStruct((PRED, N_pad), f32),
        grid_spec=pltpu.PrefetchScalarGridSpec(
            num_scalar_prefetch=0,
            grid=(N_pad // TN,),
            in_specs=[pl.BlockSpec((L, TN, P), lambda n: (0, n, 0))]
                     + [full_spec(w.shape) for w in weight_list],
            out_specs=pl.BlockSpec((PRED, TN), lambda n: (0, n)),
        ),
        compiler_params=pltpu.CompilerParams(
            dimension_semantics=("parallel",),
            vmem_limit_bytes=32 * 1024 * 1024),
    )(zp, *weight_list)

    out = out[:, :N].reshape(PRED, B, D)
    return jnp.transpose(out, (1, 0, 2))                                 # (B, pred_len, D)


def init_params(key, *, seq_len, pred_len, patch_len, stride):
    P = patch_len
    L = (seq_len - patch_len) // stride + 1 + 1
    DM = P * P
    H = 2 * pred_len
    keys = jax.random.split(key, 9)

    def lin(k, fan_in, fan_out):
        k1, k2 = jax.random.split(k)
        bound = 1.0 / np.sqrt(fan_in)
        w = jax.random.uniform(k1, (fan_in, fan_out), jnp.float32, -bound, bound)
        b = jax.random.uniform(k2, (1, fan_out), jnp.float32, -bound, bound)
        return w, b

    w_e, b_e = lin(keys[0], P, DM)
    w_lr_flat, b_lr = lin(keys[1], L * DM, pred_len)
    w_dr, b_dr = lin(keys[2], DM, P)
    bd_bound = 1.0 / np.sqrt(P)                     # depth_conv fan_in = (in/groups)*k = P
    w_d = jax.random.uniform(keys[3], (L, P), jnp.float32, -bd_bound, bd_bound)
    b_d = jax.random.uniform(keys[4], (L, 1), jnp.float32, -bd_bound, bd_bound)
    bp_bound = 1.0 / np.sqrt(L)                     # point_conv fan_in = L*1
    w_p = jax.random.uniform(keys[5], (L, L), jnp.float32, -bp_bound, bp_bound)
    b_p = jax.random.uniform(keys[6], (L, 1), jnp.float32, -bp_bound, bp_bound)
    w_fc1_flat, b_fc1 = lin(keys[7], L * P, H)
    w_fc2, b_fc2 = lin(keys[8], H, pred_len)

    # BatchNorm1d in eval mode: gamma=1, beta=0, running_mean=0, running_var=1
    # TODO(synk): training-mode BatchNorm (batch statistics) not implemented; eval semantics used.
    eps = 1e-5
    ones = jnp.ones((L, 1), jnp.float32)
    zeros = jnp.zeros((L, 1), jnp.float32)
    bn_d_scale = ones / jnp.sqrt(ones + eps)
    bn_d_shift = zeros
    bn_p_scale = ones / jnp.sqrt(ones + eps)
    bn_p_shift = zeros

    return dict(
        w_e=w_e, b_e=b_e,
        w_lr=w_lr_flat.reshape(L, DM, pred_len), b_lr=b_lr,
        w_dr=w_dr, b_dr=b_dr,
        w_d=w_d, b_d=b_d, bn_d_scale=bn_d_scale, bn_d_shift=bn_d_shift,
        w_p=w_p, b_p=b_p, bn_p_scale=bn_p_scale, bn_p_shift=bn_p_shift,
        w_fc1=w_fc1_flat.reshape(L, P, H), b_fc1=b_fc1,
        w_fc2=w_fc2, b_fc2=b_fc2,
    )


def reference_forward(x, params, *, seq_len, pred_len, patch_len, stride):
    """Pure-JAX reference mirroring the PyTorch forward (eval mode)."""
    B, S, D = x.shape
    P = patch_len
    L = (seq_len - patch_len) // stride + 1 + 1
    DM = P * P
    H = 2 * pred_len
    N = B * D

    xt = jnp.transpose(x, (0, 2, 1))
    z = jnp.concatenate([xt, jnp.repeat(xt[..., -1:], stride, axis=-1)], axis=-1)
    if z.shape[-1] < patch_len:
        z = jnp.pad(z, ((0, 0), (0, 0), (0, patch_len - z.shape[-1])))
    idx = np.arange(L)[:, None] * stride + np.arange(P)[None, :]
    zp = z[..., idx].reshape(N, L, P)

    ze = zp @ params['w_e'] + params['b_e']                               # (N, L, DM)
    z_res = ze.reshape(N, L * DM) @ params['w_lr'].reshape(L * DM, pred_len) + params['b_lr']
    res = ze @ params['w_dr'] + params['b_dr']                            # (N, L, P)
    z3 = ze.reshape(N, L, P, P)
    zd = jnp.einsum('nltk,lk->nlt', z3, params['w_d']) + params['b_d']
    zd = _gelu_ref(zd)
    zd = zd * params['bn_d_scale'] + params['bn_d_shift']
    zd = zd + res
    zpt = jnp.einsum('oc,nct->not', params['w_p'], zd) + params['b_p']
    zpt = _gelu_ref(zpt)
    zpt = zpt * params['bn_p_scale'] + params['bn_p_shift']
    h = _gelu_ref(zpt.reshape(N, L * P) @ params['w_fc1'].reshape(L * P, H) + params['b_fc1'])
    z_mlp = h @ params['w_fc2'] + params['b_fc2']
    out = (z_res + z_mlp).reshape(B, D, pred_len)
    return jnp.transpose(out, (0, 2, 1))


if __name__ == "__main__":
    SEQ_LEN, PRED_LEN, PATCH_LEN, STRIDE = 32, 16, 16, 8
    B, D = 2, 4

    key = jax.random.PRNGKey(0)
    kx, kp = jax.random.split(key)
    x = jax.random.normal(kx, (B, SEQ_LEN, D), dtype=jnp.float32)
    params = init_params(kp, seq_len=SEQ_LEN, pred_len=PRED_LEN,
                         patch_len=PATCH_LEN, stride=STRIDE)

    out = backbone_forward(x, params, seq_len=SEQ_LEN, pred_len=PRED_LEN,
                           patch_len=PATCH_LEN, stride=STRIDE)
    out = jax.block_until_ready(out)

    ref = jax.block_until_ready(
        reference_forward(x, params, seq_len=SEQ_LEN, pred_len=PRED_LEN,
                          patch_len=PATCH_LEN, stride=STRIDE))

    assert out.shape == (B, PRED_LEN, D), out.shape
    np.testing.assert_allclose(np.asarray(out), np.asarray(ref), rtol=2e-2, atol=2e-2)
    print("KERNEL_OK")
</pallas_src>

<mosaic_0001>
module attributes {stable_mosaic.version = 11 : i64} {
  func.func @kernel(%arg0: i32, %arg1: memref<4x8x16xf32, #tpu.memory_space<vmem>>, %arg2: memref<16x256xbf16, #tpu.memory_space<vmem>>, %arg3: memref<1x256xf32, #tpu.memory_space<vmem>>, %arg4: memref<4x256x16xbf16, #tpu.memory_space<vmem>>, %arg5: memref<1x16xf32, #tpu.memory_space<vmem>>, %arg6: memref<256x16xbf16, #tpu.memory_space<vmem>>, %arg7: memref<4x256x16xbf16, #tpu.memory_space<vmem>>, %arg8: memref<1x64xf32, #tpu.memory_space<vmem>>, %arg9: memref<1x64xf32, #tpu.memory_space<vmem>>, %arg10: memref<1x64xf32, #tpu.memory_space<vmem>>, %arg11: memref<64x64xbf16, #tpu.memory_space<vmem>>, %arg12: memref<1x64xf32, #tpu.memory_space<vmem>>, %arg13: memref<64x32xbf16, #tpu.memory_space<vmem>>, %arg14: memref<1x32xf32, #tpu.memory_space<vmem>>, %arg15: memref<32x16xbf16, #tpu.memory_space<vmem>>, %arg16: memref<1x16xf32, #tpu.memory_space<vmem>>, %arg17: memref<16x8xf32, #tpu.memory_space<vmem>>) attributes {dimension_semantics = [#tpu.dimension_semantics<parallel>], iteration_bounds = array<i64: 1>, scalar_prefetch = 0 : i64, scratch_operands = 0 : i64, tpu.core_type = #tpu.core_type<tc>, window_params = [{transform_indices = @transform_0, window_bounds = array<i64: 4, 8, 16>}, {pipeline_mode = #tpu.pipeline_mode<synchronous>, transform_indices = @transform_1, window_bounds = array<i64: 16, 256>}, {pipeline_mode = #tpu.pipeline_mode<synchronous>, transform_indices = @transform_2, window_bounds = array<i64: 1, 256>}, {pipeline_mode = #tpu.pipeline_mode<synchronous>, transform_indices = @transform_3, window_bounds = array<i64: 4, 256, 16>}, {pipeline_mode = #tpu.pipeline_mode<synchronous>, transform_indices = @transform_4, window_bounds = array<i64: 1, 16>}, {pipeline_mode = #tpu.pipeline_mode<synchronous>, transform_indices = @transform_5, window_bounds = array<i64: 256, 16>}, {pipeline_mode = #tpu.pipeline_mode<synchronous>, transform_indices = @transform_6, window_bounds = array<i64: 4, 256, 16>}, {pipeline_mode = #tpu.pipeline_mode<synchronous>, transform_indices = @transform_7, window_bounds = array<i64: 1, 64>}, {pipeline_mode = #tpu.pipeline_mode<synchronous>, transform_indices = @transform_8, window_bounds = array<i64: 1, 64>}, {pipeline_mode = #tpu.pipeline_mode<synchronous>, transform_indices = @transform_9, window_bounds = array<i64: 1, 64>}, {pipeline_mode = #tpu.pipeline_mode<synchronous>, transform_indices = @transform_10, window_bounds = array<i64: 64, 64>}, {pipeline_mode = #tpu.pipeline_mode<synchronous>, transform_indices = @transform_11, window_bounds = array<i64: 1, 64>}, {pipeline_mode = #tpu.pipeline_mode<synchronous>, transform_indices = @transform_12, window_bounds = array<i64: 64, 32>}, {pipeline_mode = #tpu.pipeline_mode<synchronous>, transform_indices = @transform_13, window_bounds = array<i64: 1, 32>}, {pipeline_mode = #tpu.pipeline_mode<synchronous>, transform_indices = @transform_14, window_bounds = array<i64: 32, 16>}, {pipeline_mode = #tpu.pipeline_mode<synchronous>, transform_indices = @transform_15, window_bounds = array<i64: 1, 16>}, {transform_indices = @transform_16, window_bounds = array<i64: 16, 8>}]} {
    %c0 = arith.constant 0 : index
    %c0_0 = arith.constant 0 : index
    %c0_1 = arith.constant 0 : index
    %0 = vector.load %arg1[%c0, %c0_0, %c0_1] : memref<4x8x16xf32, #tpu.memory_space<vmem>>, vector<4x8x16xf32>
    %1 = vector.shape_cast %0 : vector<4x8x16xf32> to vector<32x16xf32>
    %2 = arith.truncf %1 : vector<32x16xf32> to vector<32x16xbf16>
    %c0_2 = arith.constant 0 : index
    %c0_3 = arith.constant 0 : index
    %3 = vector.load %arg2[%c0_2, %c0_3] : memref<16x256xbf16, #tpu.memory_space<vmem>>, vector<16x256xbf16>
    %cst = arith.constant dense<0.000000e+00> : vector<32x256xf32>
    %4 = tpu.matmul %2, %3, %cst {dimension_numbers = #tpu.dot_dimension_numbers<[1], [0], [0], [1], [0, 0, 1, 1], [], []>} : vector<32x16xbf16>, vector<16x256xbf16>, vector<32x256xf32> -> vector<32x256xf32>
    %c0_4 = arith.constant 0 : index
    %c0_5 = arith.constant 0 : index
    %5 = vector.load %arg3[%c0_4, %c0_5] : memref<1x256xf32, #tpu.memory_space<vmem>>, vector<1x256xf32>
    %6 = vector.broadcast %5 : vector<1x256xf32> to vector<32x256xf32>
    %7 = arith.addf %4, %6 : vector<32x256xf32>
    %8 = arith.truncf %7 : vector<32x256xf32> to vector<32x256xbf16>
    %c0_6 = arith.constant 0 : index
    %c0_7 = arith.constant 0 : index
    %9 = vector.load %arg6[%c0_6, %c0_7] : memref<256x16xbf16, #tpu.memory_space<vmem>>, vector<256x16xbf16>
    %cst_8 = arith.constant 0.000000e+00 : f32
    %10 = vector.broadcast %cst_8 : f32 to vector<8x16xf32>
    %11 = vector.extract_strided_slice %8 {offsets = [0, 0], sizes = [8, 256], strides = [1, 1]} : vector<32x256xbf16> to vector<8x256xbf16>
    %c0_9 = arith.constant 0 : index
    %c0_10 = arith.constant 0 : index
    %c0_11 = arith.constant 0 : index
    %12 = vector.load %arg4[%c0_9, %c0_10, %c0_11] : memref<4x256x16xbf16, #tpu.memory_space<vmem>>, vector<1x256x16xbf16>
    %13 = vector.shape_cast %12 : vector<1x256x16xbf16> to vector<256x16xbf16>
    %cst_12 = arith.constant dense<0.000000e+00> : vector<8x16xf32>
    %14 = tpu.matmul %11, %13, %cst_12 {dimension_numbers = #tpu.dot_dimension_numbers<[1], [0], [0], [1], [0, 0, 1, 1], [], []>} : vector<8x256xbf16>, vector<256x16xbf16>, vector<8x16xf32> -> vector<8x16xf32>
    %15 = arith.addf %10, %14 : vector<8x16xf32>
    %cst_13 = arith.constant dense<0.000000e+00> : vector<8x16xf32>
    %16 = tpu.matmul %11, %9, %cst_13 {dimension_numbers = #tpu.dot_dimension_numbers<[1], [0], [0], [1], [0, 0, 1, 1], [], []>} : vector<8x256xbf16>, vector<256x16xbf16>, vector<8x16xf32> -> vector<8x16xf32>
    %c0_14 = arith.constant 0 : index
    %c0_15 = arith.constant 0 : index
    %c0_16 = arith.constant 0 : index
    %17 = vector.load %arg7[%c0_14, %c0_15, %c0_16] : memref<4x256x16xbf16, #tpu.memory_space<vmem>>, vector<1x256x16xbf16>
    %18 = vector.shape_cast %17 : vector<1x256x16xbf16> to vector<256x16xbf16>
    %cst_17 = arith.constant dense<0.000000e+00> : vector<8x16xf32>
    %19 = tpu.matmul %11, %18, %cst_17 {dimension_numbers = #tpu.dot_dimension_numbers<[1], [0], [0], [1], [0, 0, 1, 1], [], []>} : vector<8x256xbf16>, vector<256x16xbf16>, vector<8x16xf32> -> vector<8x16xf32>
    %20 = vector.extract_strided_slice %8 {offsets = [8, 0], sizes = [8, 256], strides = [1, 1]} : vector<32x256xbf16> to vector<8x256xbf16>
    %c1 = arith.constant 1 : index
    %c0_18 = arith.constant 0 : index
    %c0_19 = arith.constant 0 : index
    %21 = vector.load %arg4[%c1, %c0_18, %c0_19] : memref<4x256x16xbf16, #tpu.memory_space<vmem>>, vector<1x256x16xbf16>
    %22 = vector.shape_cast %21 : vector<1x256x16xbf16> to vector<256x16xbf16>
    %cst_20 = arith.constant dense<0.000000e+00> : vector<8x16xf32>
    %23 = tpu.matmul %20, %22, %cst_20 {dimension_numbers = #tpu.dot_dimension_numbers<[1], [0], [0], [1], [0, 0, 1, 1], [], []>} : vector<8x256xbf16>, vector<256x16xbf16>, vector<8x16xf32> -> vector<8x16xf32>
    %24 = arith.addf %15, %23 : vector<8x16xf32>
    %cst_21 = arith.constant dense<0.000000e+00> : vector<8x16xf32>
    %25 = tpu.matmul %20, %9, %cst_21 {dimension_numbers = #tpu.dot_dimension_numbers<[1], [0], [0], [1], [0, 0, 1, 1], [], []>} : vector<8x256xbf16>, vector<256x16xbf16>, vector<8x16xf32> -> vector<8x16xf32>
    %c1_22 = arith.constant 1 : index
    %c0_23 = arith.constant 0 : index
    %c0_24 = arith.constant 0 : index
    %26 = vector.load %arg7[%c1_22, %c0_23, %c0_24] : memref<4x256x16xbf16, #tpu.memory_space<vmem>>, vector<1x256x16xbf16>
    %27 = vector.shape_cast %26 : vector<1x256x16xbf16> to vector<256x16xbf16>
    %cst_25 = arith.constant dense<0.000000e+00> : vector<8x16xf32>
    %28 = tpu.matmul %20, %27, %cst_25 {dimension_numbers = #tpu.dot_dimension_numbers<[1], [0], [0], [1], [0, 0, 1, 1], [], []>} : vector<8x256xbf16>, vector<256x16xbf16>, vector<8x16xf32> -> vector<8x16xf32>
    %29 = vector.extract_strided_slice %8 {offsets = [16, 0], sizes = [8, 256], strides = [1, 1]} : vector<32x256xbf16> to vector<8x256xbf16>
    %c2 = arith.constant 2 : index
    %c0_26 = arith.constant 0 : index
    %c0_27 = arith.constant 0 : index
    %30 = vector.load %arg4[%c2, %c0_26, %c0_27] : memref<4x256x16xbf16, #tpu.memory_space<vmem>>, vector<1x256x16xbf16>
    %31 = vector.shape_cast %30 : vector<1x256x16xbf16> to vector<256x16xbf16>
    %cst_28 = arith.constant dense<0.000000e+00> : vector<8x16xf32>
    %32 = tpu.matmul %29, %31, %cst_28 {dimension_numbers = #tpu.dot_dimension_numbers<[1], [0], [0], [1], [0, 0, 1, 1], [], []>} : vector<8x256xbf16>, vector<256x16xbf16>, vector<8x16xf32> -> vector<8x16xf32>
    %33 = arith.addf %24, %32 : vector<8x16xf32>
    %cst_29 = arith.constant dense<0.000000e+00> : vector<8x16xf32>
    %34 = tpu.matmul %29, %9, %cst_29 {dimension_numbers = #tpu.dot_dimension_numbers<[1], [0], [0], [1], [0, 0, 1, 1], [], []>} : vector<8x256xbf16>, vector<256x16xbf16>, vector<8x16xf32> -> vector<8x16xf32>
    %c2_30 = arith.constant 2 : index
    %c0_31 = arith.constant 0 : index
    %c0_32 = arith.constant 0 : index
    %35 = vector.load %arg7[%c2_30, %c0_31, %c0_32] : memref<4x256x16xbf16, #tpu.memory_space<vmem>>, vector<1x256x16xbf16>
    %36 = vector.shape_cast %35 : vector<1x256x16xbf16> to vector<256x16xbf16>
    %cst_33 = arith.constant dense<0.000000e+00> : vector<8x16xf32>
    %37 = tpu.matmul %29, %36, %cst_33 {dimension_numbers = #tpu.dot_dimension_numbers<[1], [0], [0], [1], [0, 0, 1, 1], [], []>} : vector<8x256xbf16>, vector<256x16xbf16>, vector<8x16xf32> -> vector<8x16xf32>
    %38 = vector.extract_strided_slice %8 {offsets = [24, 0], sizes = [8, 256], strides = [1, 1]} : vector<32x256xbf16> to vector<8x256xbf16>
    %c3 = arith.constant 3 : index
    %c0_34 = arith.constant 0 : index
    %c0_35 = arith.constant 0 : index
    %39 = vector.load %arg4[%c3, %c0_34, %c0_35] : memref<4x256x16xbf16, #tpu.memory_space<vmem>>, vector<1x256x16xbf16>
    %40 = vector.shape_cast %39 : vector<1x256x16xbf16> to vector<256x16xbf16>
    %cst_36 = arith.constant dense<0.000000e+00> : vector<8x16xf32>
    %41 = tpu.matmul %38, %40, %cst_36 {dimension_numbers = #tpu.dot_dimension_numbers<[1], [0], [0], [1], [0, 0, 1, 1], [], []>} : vector<8x256xbf16>, vector<256x16xbf16>, vector<8x16xf32> -> vector<8x16xf32>
    %42 = arith.addf %33, %41 : vector<8x16xf32>
    %cst_37 = arith.constant dense<0.000000e+00> : vector<8x16xf32>
    %43 = tpu.matmul %38, %9, %cst_37 {dimension_numbers = #tpu.dot_dimension_numbers<[1], [0], [0], [1], [0, 0, 1, 1], [], []>} : vector<8x256xbf16>, vector<256x16xbf16>, vector<8x16xf32> -> vector<8x16xf32>
    %c3_38 = arith.constant 3 : index
    %c0_39 = arith.constant 0 : index
    %c0_40 = arith.constant 0 : index
    %44 = vector.load %arg7[%c3_38, %c0_39, %c0_40] : memref<4x256x16xbf16, #tpu.memory_space<vmem>>, vector<1x256x16xbf16>
    %45 = vector.shape_cast %44 : vector<1x256x16xbf16> to vector<256x16xbf16>
    %cst_41 = arith.constant dense<0.000000e+00> : vector<8x16xf32>
    %46 = tpu.matmul %38, %45, %cst_41 {dimension_numbers = #tpu.dot_dimension_numbers<[1], [0], [0], [1], [0, 0, 1, 1], [], []>} : vector<8x256xbf16>, vector<256x16xbf16>, vector<8x16xf32> -> vector<8x16xf32>
    %47 = tpu.concatenate %16, %25, %34, %43 in 1 : vector<8x16xf32>, vector<8x16xf32>, vector<8x16xf32>, vector<8x16xf32> -> vector<8x64xf32>
    %48 = tpu.concatenate %19, %28, %37, %46 in 1 : vector<8x16xf32>, vector<8x16xf32>, vector<8x16xf32>, vector<8x16xf32> -> vector<8x64xf32>
    %c0_42 = arith.constant 0 : index
    %c0_43 = arith.constant 0 : index
    %49 = vector.load %arg8[%c0_42, %c0_43] : memref<1x64xf32, #tpu.memory_space<vmem>>, vector<1x64xf32>
    %50 = vector.broadcast %49 : vector<1x64xf32> to vector<8x64xf32>
    %51 = arith.addf %48, %50 : vector<8x64xf32>
    %cst_44 = arith.constant 5.000000e-01 : f32
    %52 = vector.broadcast %cst_44 : f32 to vector<8x64xf32>
    %53 = arith.mulf %52, %51 : vector<8x64xf32>
    %cst_45 = arith.constant 0.707106769 : f32
    %54 = vector.broadcast %cst_45 : f32 to vector<8x64xf32>
    %55 = arith.mulf %51, %54 : vector<8x64xf32>
    %cst_46 = arith.constant 0.000000e+00 : f32
    %56 = vector.broadcast %cst_46 : f32 to vector<8x64xf32>
    %57 = arith.cmpf oge, %55, %56 : vector<8x64xf32>
    %cst_47 = arith.constant 0.000000e+00 : f32
    %58 = vector.broadcast %cst_47 : f32 to vector<8x64xf32>
    %59 = arith.subf %58, %55 : vector<8x64xf32>
    %60 = arith.select %57, %55, %59 : vector<8x64xi1>, vector<8x64xf32>
    %cst_48 = arith.constant 0.327591091 : f32
    %61 = vector.broadcast %cst_48 : f32 to vector<8x64xf32>
    %62 = arith.mulf %61, %60 : vector<8x64xf32>
    %cst_49 = arith.constant 1.000000e+00 : f32
    %63 = vector.broadcast %cst_49 : f32 to vector<8x64xf32>
    %64 = arith.addf %63, %62 : vector<8x64xf32>
    %cst_50 = arith.constant 1.000000e+00 : f32
    %65 = vector.broadcast %cst_50 : f32 to vector<8x64xf32>
    %66 = arith.divf %65, %64 : vector<8x64xf32>
    %cst_51 = arith.constant 1.06140542 : f32
    %67 = vector.broadcast %cst_51 : f32 to vector<8x64xf32>
    %68 = arith.mulf %66, %67 : vector<8x64xf32>
    %cst_52 = arith.constant -1.45315206 : f32
    %69 = vector.broadcast %cst_52 : f32 to vector<8x64xf32>
    %70 = arith.addf %69, %68 : vector<8x64xf32>
    %71 = arith.mulf %66, %70 : vector<8x64xf32>
    %cst_53 = arith.constant 1.42141378 : f32
    %72 = vector.broadcast %cst_53 : f32 to vector<8x64xf32>
    %73 = arith.addf %72, %71 : vector<8x64xf32>
    %74 = arith.mulf %66, %73 : vector<8x64xf32>
    %cst_54 = arith.constant -0.284496725 : f32
    %75 = vector.broadcast %cst_54 : f32 to vector<8x64xf32>
    %76 = arith.addf %75, %74 : vector<8x64xf32>
    %77 = arith.mulf %66, %76 : vector<8x64xf32>
    %cst_55 = arith.constant 0.254829586 : f32
    %78 = vector.broadcast %cst_55 : f32 to vector<8x64xf32>
    %79 = arith.addf %78, %77 : vector<8x64xf32>
    %80 = arith.mulf %66, %79 : vector<8x64xf32>
    %cst_56 = arith.constant 0.000000e+00 : f32
    %81 = vector.broadcast %cst_56 : f32 to vector<8x64xf32>
    %82 = arith.subf %81, %60 : vector<8x64xf32>
    %83 = arith.mulf %82, %60 : vector<8x64xf32>
    %84 = math.exp %83 : vector<8x64xf32>
    %85 = arith.mulf %80, %84 : vector<8x64xf32>
    %cst_57 = arith.constant 1.000000e+00 : f32
    %86 = vector.broadcast %cst_57 : f32 to vector<8x64xf32>
    %87 = arith.subf %86, %85 : vector<8x64xf32>
    %cst_58 = arith.constant 0.000000e+00 : f32
    %88 = vector.broadcast %cst_58 : f32 to vector<8x64xf32>
    %89 = arith.cmpf oge, %55, %88 : vector<8x64xf32>
    %cst_59 = arith.constant 0.000000e+00 : f32
    %90 = vector.broadcast %cst_59 : f32 to vector<8x64xf32>
    %91 = arith.subf %90, %87 : vector<8x64xf32>
    %92 = arith.select %89, %87, %91 : vector<8x64xi1>, vector<8x64xf32>
    %cst_60 = arith.constant 1.000000e+00 : f32
    %93 = vector.broadcast %cst_60 : f32 to vector<8x64xf32>
    %94 = arith.addf %93, %92 : vector<8x64xf32>
    %95 = arith.mulf %53, %94 : vector<8x64xf32>
    %c0_61 = arith.constant 0 : index
    %c0_62 = arith.constant 0 : index
    %96 = vector.load %arg9[%c0_61, %c0_62] : memref<1x64xf32, #tpu.memory_space<vmem>>, vector<1x64xf32>
    %97 = vector.broadcast %96 : vector<1x64xf32> to vector<8x64xf32>
    %98 = arith.mulf %95, %97 : vector<8x64xf32>
    %c0_63 = arith.constant 0 : index
    %c0_64 = arith.constant 0 : index
    %99 = vector.load %arg10[%c0_63, %c0_64] : memref<1x64xf32, #tpu.memory_space<vmem>>, vector<1x64xf32>
    %100 = vector.broadcast %99 : vector<1x64xf32> to vector<8x64xf32>
    %101 = arith.addf %98, %100 : vector<8x64xf32>
    %102 = arith.addf %101, %47 : vector<8x64xf32>
    %103 = arith.truncf %102 : vector<8x64xf32> to vector<8x64xbf16>
    %c0_65 = arith.constant 0 : index
    %c0_66 = arith.constant 0 : index
    %104 = vector.load %arg11[%c0_65, %c0_66] : memref<64x64xbf16, #tpu.memory_space<vmem>>, vector<64x64xbf16>
    %cst_67 = arith.constant dense<0.000000e+00> : vector<8x64xf32>
    %105 = tpu.matmul %103, %104, %cst_67 {dimension_numbers = #tpu.dot_dimension_numbers<[1], [0], [0], [1], [0, 0, 1, 1], [], []>} : vector<8x64xbf16>, vector<64x64xbf16>, vector<8x64xf32> -> vector<8x64xf32>
    %c0_68 = arith.constant 0 : index
    %c0_69 = arith.constant 0 : index
    %106 = vector.load %arg12[%c0_68, %c0_69] : memref<1x64xf32, #tpu.memory_space<vmem>>, vector<1x64xf32>
    %107 = vector.broadcast %106 : vector<1x64xf32> to vector<8x64xf32>
    %108 = arith.addf %105, %107 : vector<8x64xf32>
    %cst_70 = arith.constant 5.000000e-01 : f32
    %109 = vector.broadcast %cst_70 : f32 to vector<8x64xf32>
    %110 = arith.mulf %109, %108 : vector<8x64xf32>
    %cst_71 = arith.constant 0.707106769 : f32
    %111 = vector.broadcast %cst_71 : f32 to vector<8x64xf32>
    %112 = arith.mulf %108, %111 : vector<8x64xf32>
    %cst_72 = arith.constant 0.000000e+00 : f32
    %113 = vector.broadcast %cst_72 : f32 to vector<8x64xf32>
    %114 = arith.cmpf oge, %112, %113 : vector<8x64xf32>
    %cst_73 = arith.constant 0.000000e+00 : f32
    %115 = vector.broadcast %cst_73 : f32 to vector<8x64xf32>
    %116 = arith.subf %115, %112 : vector<8x64xf32>
    %117 = arith.select %114, %112, %116 : vector<8x64xi1>, vector<8x64xf32>
    %cst_74 = arith.constant 0.327591091 : f32
    %118 = vector.broadcast %cst_74 : f32 to vector<8x64xf32>
    %119 = arith.mulf %118, %117 : vector<8x64xf32>
    %cst_75 = arith.constant 1.000000e+00 : f32
    %120 = vector.broadcast %cst_75 : f32 to vector<8x64xf32>
    %121 = arith.addf %120, %119 : vector<8x64xf32>
    %cst_76 = arith.constant 1.000000e+00 : f32
    %122 = vector.broadcast %cst_76 : f32 to vector<8x64xf32>
    %123 = arith.divf %122, %121 : vector<8x64xf32>
    %cst_77 = arith.constant 1.06140542 : f32
    %124 = vector.broadcast %cst_77 : f32 to vector<8x64xf32>
    %125 = arith.mulf %123, %124 : vector<8x64xf32>
    %cst_78 = arith.constant -1.45315206 : f32
    %126 = vector.broadcast %cst_78 : f32 to vector<8x64xf32>
    %127 = arith.addf %126, %125 : vector<8x64xf32>
    %128 = arith.mulf %123, %127 : vector<8x64xf32>
    %cst_79 = arith.constant 1.42141378 : f32
    %129 = vector.broadcast %cst_79 : f32 to vector<8x64xf32>
    %130 = arith.addf %129, %128 : vector<8x64xf32>
    %131 = arith.mulf %123, %130 : vector<8x64xf32>
    %cst_80 = arith.constant -0.284496725 : f32
    %132 = vector.broadcast %cst_80 : f32 to vector<8x64xf32>
    %133 = arith.addf %132, %131 : vector<8x64xf32>
    %134 = arith.mulf %123, %133 : vector<8x64xf32>
    %cst_81 = arith.constant 0.254829586 : f32
    %135 = vector.broadcast %cst_81 : f32 to vector<8x64xf32>
    %136 = arith.addf %135, %134 : vector<8x64xf32>
    %137 = arith.mulf %123, %136 : vector<8x64xf32>
    %cst_82 = arith.constant 0.000000e+00 : f32
    %138 = vector.broadcast %cst_82 : f32 to vector<8x64xf32>
    %139 = arith.subf %138, %117 : vector<8x64xf32>
    %140 = arith.mulf %139, %117 : vector<8x64xf32>
    %141 = math.exp %140 : vector<8x64xf32>
    %142 = arith.mulf %137, %141 : vector<8x64xf32>
    %cst_83 = arith.constant 1.000000e+00 : f32
    %143 = vector.broadcast %cst_83 : f32 to vector<8x64xf32>
    %144 = arith.subf %143, %142 : vector<8x64xf32>
    %cst_84 = arith.constant 0.000000e+00 : f32
    %145 = vector.broadcast %cst_84 : f32 to vector<8x64xf32>
    %146 = arith.cmpf oge, %112, %145 : vector<8x64xf32>
    %cst_85 = arith.constant 0.000000e+00 : f32
    %147 = vector.broadcast %cst_85 : f32 to vector<8x64xf32>
    %148 = arith.subf %147, %144 : vector<8x64xf32>
    %149 = arith.select %146, %144, %148 : vector<8x64xi1>, vector<8x64xf32>
    %cst_86 = arith.constant 1.000000e+00 : f32
    %150 = vector.broadcast %cst_86 : f32 to vector<8x64xf32>
    %151 = arith.addf %150, %149 : vector<8x64xf32>
    %152 = arith.mulf %110, %151 : vector<8x64xf32>
    %153 = arith.truncf %152 : vector<8x64xf32> to vector<8x64xbf16>
    %c0_87 = arith.constant 0 : index
    %c0_88 = arith.constant 0 : index
    %154 = vector.load %arg13[%c0_87, %c0_88] : memref<64x32xbf16, #tpu.memory_space<vmem>>, vector<64x32xbf16>
    %cst_89 = arith.constant dense<0.000000e+00> : vector<8x32xf32>
    %155 = tpu.matmul %153, %154, %cst_89 {dimension_numbers = #tpu.dot_dimension_numbers<[1], [0], [0], [1], [0, 0, 1, 1], [], []>} : vector<8x64xbf16>, vector<64x32xbf16>, vector<8x32xf32> -> vector<8x32xf32>
    %c0_90 = arith.constant 0 : index
    %c0_91 = arith.constant 0 : index
    %156 = vector.load %arg14[%c0_90, %c0_91] : memref<1x32xf32, #tpu.memory_space<vmem>>, vector<1x32xf32>
    %157 = vector.broadcast %156 : vector<1x32xf32> to vector<8x32xf32>
    %158 = arith.addf %155, %157 : vector<8x32xf32>
    %cst_92 = arith.constant 5.000000e-01 : f32
    %159 = vector.broadcast %cst_92 : f32 to vector<8x32xf32>
    %160 = arith.mulf %159, %158 : vector<8x32xf32>
    %cst_93 = arith.constant 0.707106769 : f32
    %161 = vector.broadcast %cst_93 : f32 to vector<8x32xf32>
    %162 = arith.mulf %158, %161 : vector<8x32xf32>
    %cst_94 = arith.constant 0.000000e+00 : f32
    %163 = vector.broadcast %cst_94 : f32 to vector<8x32xf32>
    %164 = arith.cmpf oge, %162, %163 : vector<8x32xf32>
    %cst_95 = arith.constant 0.000000e+00 : f32
    %165 = vector.broadcast %cst_95 : f32 to vector<8x32xf32>
    %166 = arith.subf %165, %162 : vector<8x32xf32>
    %167 = arith.select %164, %162, %166 : vector<8x32xi1>, vector<8x32xf32>
    %cst_96 = arith.constant 0.327591091 : f32
    %168 = vector.broadcast %cst_96 : f32 to vector<8x32xf32>
    %169 = arith.mulf %168, %167 : vector<8x32xf32>
    %cst_97 = arith.constant 1.000000e+00 : f32
    %170 = vector.broadcast %cst_97 : f32 to vector<8x32xf32>
    %171 = arith.addf %170, %169 : vector<8x32xf32>
    %cst_98 = arith.constant 1.000000e+00 : f32
    %172 = vector.broadcast %cst_98 : f32 to vector<8x32xf32>
    %173 = arith.divf %172, %171 : vector<8x32xf32>
    %cst_99 = arith.constant 1.06140542 : f32
    %174 = vector.broadcast %cst_99 : f32 to vector<8x32xf32>
    %175 = arith.mulf %173, %174 : vector<8x32xf32>
    %cst_100 = arith.constant -1.45315206 : f32
    %176 = vector.broadcast %cst_100 : f32 to vector<8x32xf32>
    %177 = arith.addf %176, %175 : vector<8x32xf32>
    %178 = arith.mulf %173, %177 : vector<8x32xf32>
    %cst_101 = arith.constant 1.42141378 : f32
    %179 = vector.broadcast %cst_101 : f32 to vector<8x32xf32>
    %180 = arith.addf %179, %178 : vector<8x32xf32>
    %181 = arith.mulf %173, %180 : vector<8x32xf32>
    %cst_102 = arith.constant -0.284496725 : f32
    %182 = vector.broadcast %cst_102 : f32 to vector<8x32xf32>
    %183 = arith.addf %182, %181 : vector<8x32xf32>
    %184 = arith.mulf %173, %183 : vector<8x32xf32>
    %cst_103 = arith.constant 0.254829586 : f32
    %185 = vector.broadcast %cst_103 : f32 to vector<8x32xf32>
    %186 = arith.addf %185, %184 : vector<8x32xf32>
    %187 = arith.mulf %173, %186 : vector<8x32xf32>
    %cst_104 = arith.constant 0.000000e+00 : f32
    %188 = vector.broadcast %cst_104 : f32 to vector<8x32xf32>
    %189 = arith.subf %188, %167 : vector<8x32xf32>
    %190 = arith.mulf %189, %167 : vector<8x32xf32>
    %191 = math.exp %190 : vector<8x32xf32>
    %192 = arith.mulf %187, %191 : vector<8x32xf32>
    %cst_105 = arith.constant 1.000000e+00 : f32
    %193 = vector.broadcast %cst_105 : f32 to vector<8x32xf32>
    %194 = arith.subf %193, %192 : vector<8x32xf32>
    %cst_106 = arith.constant 0.000000e+00 : f32
    %195 = vector.broadcast %cst_106 : f32 to vector<8x32xf32>
    %196 = arith.cmpf oge, %162, %195 : vector<8x32xf32>
    %cst_107 = arith.constant 0.000000e+00 : f32
    %197 = vector.broadcast %cst_107 : f32 to vector<8x32xf32>
    %198 = arith.subf %197, %194 : vector<8x32xf32>
    %199 = arith.select %196, %194, %198 : vector<8x32xi1>, vector<8x32xf32>
    %cst_108 = arith.constant 1.000000e+00 : f32
    %200 = vector.broadcast %cst_108 : f32 to vector<8x32xf32>
    %201 = arith.addf %200, %199 : vector<8x32xf32>
    %202 = arith.mulf %160, %201 : vector<8x32xf32>
    %203 = arith.truncf %202 : vector<8x32xf32> to vector<8x32xbf16>
    %c0_109 = arith.constant 0 : index
    %c0_110 = arith.constant 0 : index
    %204 = vector.load %arg15[%c0_109, %c0_110] : memref<32x16xbf16, #tpu.memory_space<vmem>>, vector<32x16xbf16>
    %cst_111 = arith.constant dense<0.000000e+00> : vector<8x16xf32>
    %205 = tpu.matmul %203, %204, %cst_111 {dimension_numbers = #tpu.dot_dimension_numbers<[1], [0], [0], [1], [0, 0, 1, 1], [], []>} : vector<8x32xbf16>, vector<32x16xbf16>, vector<8x16xf32> -> vector<8x16xf32>
    %c0_112 = arith.constant 0 : index
    %c0_113 = arith.constant 0 : index
    %206 = vector.load %arg16[%c0_112, %c0_113] : memref<1x16xf32, #tpu.memory_space<vmem>>, vector<1x16xf32>
    %207 = vector.broadcast %206 : vector<1x16xf32> to vector<8x16xf32>
    %208 = arith.addf %205, %207 : vector<8x16xf32>
    %c0_114 = arith.constant 0 : index
    %c0_115 = arith.constant 0 : index
    %209 = vector.load %arg5[%c0_114, %c0_115] : memref<1x16xf32, #tpu.memory_space<vmem>>, vector<1x16xf32>
    %210 = vector.broadcast %209 : vector<1x16xf32> to vector<8x16xf32>
    %211 = arith.addf %42, %210 : vector<8x16xf32>
    %212 = arith.addf %211, %208 : vector<8x16xf32>
    %213 = tpu.transpose %212, [1, 0] : vector<8x16xf32> -> vector<16x8xf32>
    %c0_116 = arith.constant 0 : index
    %c0_117 = arith.constant 0 : index
    %214 = vector.load %arg17[%c0_116, %c0_117] : memref<16x8xf32, #tpu.memory_space<vmem>>, vector<16x8xf32>
    tpu.vector_store %arg17[%c0_116, %c0_117], %213 {strides = array<i32>} : memref<16x8xf32, #tpu.memory_space<vmem>>, vector<16x8xf32>,
    return
  }
  func.func @transform_0(%arg0: i32) -> (i32, i32, i32) {
    %c0_i32 = arith.constant 0 : i32
    %c0_i32_0 = arith.constant 0 : i32
    %c0_i32_1 = arith.constant 0 : i32
    return %c0_i32, %arg0, %c0_i32_0 : i32, i32, i32
  }
  func.func @transform_1(%arg0: i32) -> (i32, i32) {
    %c0_i32 = arith.constant 0 : i32
    %c0_i32_0 = arith.constant 0 : i32
    %c0_i32_1 = arith.constant 0 : i32
    return %c0_i32, %c0_i32_0 : i32, i32
  }
  func.func @transform_2(%arg0: i32) -> (i32, i32) {
    %c0_i32 = arith.constant 0 : i32
    %c0_i32_0 = arith.constant 0 : i32
    %c0_i32_1 = arith.constant 0 : i32
    return %c0_i32, %c0_i32_0 : i32, i32
  }
  func.func @transform_3(%arg0: i32) -> (i32, i32, i32) {
    %c0_i32 = arith.constant 0 : i32
    %c0_i32_0 = arith.constant 0 : i32
    %c0_i32_1 = arith.constant 0 : i32
    %c0_i32_2 = arith.constant 0 : i32
    return %c0_i32, %c0_i32_0, %c0_i32_1 : i32, i32, i32
  }
  func.func @transform_4(%arg0: i32) -> (i32, i32) {
    %c0_i32 = arith.constant 0 : i32
    %c0_i32_0 = arith.constant 0 : i32
    %c0_i32_1 = arith.constant 0 : i32
    return %c0_i32, %c0_i32_0 : i32, i32
  }
  func.func @transform_5(%arg0: i32) -> (i32, i32) {
    %c0_i32 = arith.constant 0 : i32
    %c0_i32_0 = arith.constant 0 : i32
    %c0_i32_1 = arith.constant 0 : i32
    return %c0_i32, %c0_i32_0 : i32, i32
  }
  func.func @transform_6(%arg0: i32) -> (i32, i32, i32) {
    %c0_i32 = arith.constant 0 : i32
    %c0_i32_0 = arith.constant 0 : i32
    %c0_i32_1 = arith.constant 0 : i32
    %c0_i32_2 = arith.constant 0 : i32
    return %c0_i32, %c0_i32_0, %c0_i32_1 : i32, i32, i32
  }
  func.func @transform_7(%arg0: i32) -> (i32, i32) {
    %c0_i32 = arith.constant 0 : i32
    %c0_i32_0 = arith.constant 0 : i32
    %c0_i32_1 = arith.constant 0 : i32
    return %c0_i32, %c0_i32_0 : i32, i32
  }
  func.func @transform_8(%arg0: i32) -> (i32, i32) {
    %c0_i32 = arith.constant 0 : i32
    %c0_i32_0 = arith.constant 0 : i32
    %c0_i32_1 = arith.constant 0 : i32
    return %c0_i32, %c0_i32_0 : i32, i32
  }
  func.func @transform_9(%arg0: i32) -> (i32, i32) {
    %c0_i32 = arith.constant 0 : i32
    %c0_i32_0 = arith.constant 0 : i32
    %c0_i32_1 = arith.constant 0 : i32
    return %c0_i32, %c0_i32_0 : i32, i32
  }
  func.func @transform_10(%arg0: i32) -> (i32, i32) {
    %c0_i32 = arith.constant 0 : i32
    %c0_i32_0 = arith.constant 0 : i32
    %c0_i32_1 = arith.constant 0 : i32
    return %c0_i32, %c0_i32_0 : i32, i32
  }
  func.func @transform_11(%arg0: i32) -> (i32, i32) {
    %c0_i32 = arith.constant 0 : i32
    %c0_i32_0 = arith.constant 0 : i32
    %c0_i32_1 = arith.constant 0 : i32
    return %c0_i32, %c0_i32_0 : i32, i32
  }
  func.func @transform_12(%arg0: i32) -> (i32, i32) {
    %c0_i32 = arith.constant 0 : i32
    %c0_i32_0 = arith.constant 0 : i32
    %c0_i32_1 = arith.constant 0 : i32
    return %c0_i32, %c0_i32_0 : i32, i32
  }
  func.func @transform_13(%arg0: i32) -> (i32, i32) {
    %c0_i32 = arith.constant 0 : i32
    %c0_i32_0 = arith.constant 0 : i32
    %c0_i32_1 = arith.constant 0 : i32
    return %c0_i32, %c0_i32_0 : i32, i32
  }
  func.func @transform_14(%arg0: i32) -> (i32, i32) {
    %c0_i32 = arith.constant 0 : i32
    %c0_i32_0 = arith.constant 0 : i32
    %c0_i32_1 = arith.constant 0 : i32
    return %c0_i32, %c0_i32_0 : i32, i32
  }
  func.func @transform_15(%arg0: i32) -> (i32, i32) {
    %c0_i32 = arith.constant 0 : i32
    %c0_i32_0 = arith.constant 0 : i32
    %c0_i32_1 = arith.constant 0 : i32
    return %c0_i32, %c0_i32_0 : i32, i32
  }
  func.func @transform_16(%arg0: i32) -> (i32, i32) {
    %c0_i32 = arith.constant 0 : i32
    %c0_i32_0 = arith.constant 0 : i32
    return %c0_i32, %arg0 : i32, i32
  }
}

</mosaic_0001>

<llo_original>
// kernel: tpu_custom_call.1
$region0: #{tpu_custom_call.1}
  #allocation0 [shape = 'u32[]', space=smem, size = 0x4, offset = 0x4, fixed_abs, tag = 'smem constant byte address 0x4 - core index']
  #allocation1 [shape = 'u32[144,128]{1,0:T(1,128)}', space=vmem, size = 0x12000, scoped, tag = 'internal scratch']
  %s0 = inlined_call_operand.vmem [shape: f32[4,8,16], index: 0, kind: input, shape index: {}]
  %s1 = inlined_call_operand.vmem [shape: bf16[16,256], index: 1, kind: input, shape index: {}]
  %s2 = inlined_call_operand.vmem [shape: f32[1,256], index: 2, kind: input, shape index: {}]
  %s3 = inlined_call_operand.vmem [shape: bf16[4,256,16], index: 3, kind: input, shape index: {}]
  %s4 = inlined_call_operand.vmem [shape: f32[1,16], index: 4, kind: input, shape index: {}]
  %s5 = inlined_call_operand.vmem [shape: bf16[256,16], index: 5, kind: input, shape index: {}]
  %s6 = inlined_call_operand.vmem [shape: bf16[4,256,16], index: 6, kind: input, shape index: {}]
  %s7 = inlined_call_operand.vmem [shape: f32[1,64], index: 7, kind: input, shape index: {}]
  %s8 = inlined_call_operand.vmem [shape: f32[1,64], index: 8, kind: input, shape index: {}]
  %s9 = inlined_call_operand.vmem [shape: f32[1,64], index: 9, kind: input, shape index: {}]
  %s10 = inlined_call_operand.vmem [shape: bf16[64,64], index: 10, kind: input, shape index: {}]
  %s11 = inlined_call_operand.vmem [shape: f32[1,64], index: 11, kind: input, shape index: {}]
  %s12 = inlined_call_operand.vmem [shape: bf16[64,32], index: 12, kind: input, shape index: {}]
  %s13 = inlined_call_operand.vmem [shape: f32[1,32], index: 13, kind: input, shape index: {}]
  %s14 = inlined_call_operand.vmem [shape: bf16[32,16], index: 14, kind: input, shape index: {}]
  %s15 = inlined_call_operand.vmem [shape: f32[1,16], index: 15, kind: input, shape index: {}]
  %s16 = inlined_call_operand.vmem [shape: f32[16,8], index: 16, kind: output, shape index: {}]
  %s17 = sld [smem:[#allocation0]]
  $region74: #{tpu_custom_call.1} parent=0
    _
  %s19 = ssub.s32 1, %s17
  %s20 = scalar_select 0, %s19, %s17
  // Predicated region
  $region2: #{tpu_custom_call.1} parent=0 // pred_check
    _
  $region3: #{tpu_custom_call.1} parent=0 // pred_check_branch
    %22 = sbr.rel (0) target = $region5
  $region4: #{tpu_custom_call.1} parent=0 // pred_region
    _
  $region5: #{tpu_custom_call.1} parent=0 // pred_fallthru
    _
  // Predicated region
  $region6: #{tpu_custom_call.1} parent=0 // pred_check
    _
  $region7: #{tpu_custom_call.1} parent=0 // pred_check_branch
    %24 = sbr.rel (0) target = $region9
  $region8: #{tpu_custom_call.1} parent=0 // pred_region
    _
  $region9: #{tpu_custom_call.1} parent=0 // pred_fallthru
    _
  // Predicated region
  $region10: #{tpu_custom_call.1} parent=0 // pred_check
    _
  $region11: #{tpu_custom_call.1} parent=0 // pred_check_branch
    %26 = sbr.rel (0) target = $region13
  $region12: #{tpu_custom_call.1} parent=0 // pred_region
    _
  $region13: #{tpu_custom_call.1} parent=0 // pred_fallthru
    _
  // Predicated region
  $region14: #{tpu_custom_call.1} parent=0 // pred_check
    _
  $region15: #{tpu_custom_call.1} parent=0 // pred_check_branch
    %28 = sbr.rel (0) target = $region17
  $region16: #{tpu_custom_call.1} parent=0 // pred_region
    _
  $region17: #{tpu_custom_call.1} parent=0 // pred_fallthru
    _
  // Predicated region
  $region18: #{tpu_custom_call.1} parent=0 // pred_check
    _
  $region19: #{tpu_custom_call.1} parent=0 // pred_check_branch
    %30 = sbr.rel (0) target = $region21
  $region20: #{tpu_custom_call.1} parent=0 // pred_region
    _
  $region21: #{tpu_custom_call.1} parent=0 // pred_fallthru
    _
  // Predicated region
  $region22: #{tpu_custom_call.1} parent=0 // pred_check
    _
  $region23: #{tpu_custom_call.1} parent=0 // pred_check_branch
    %32 = sbr.rel (0) target = $region25
  $region24: #{tpu_custom_call.1} parent=0 // pred_region
    _
  $region25: #{tpu_custom_call.1} parent=0 // pred_fallthru
    _
  // Predicated region
  $region26: #{tpu_custom_call.1} parent=0 // pred_check
    _
  $region27: #{tpu_custom_call.1} parent=0 // pred_check_branch
    %34 = sbr.rel (0) target = $region29
  $region28: #{tpu_custom_call.1} parent=0 // pred_region
    _
  $region29: #{tpu_custom_call.1} parent=0 // pred_fallthru
    _
  // Predicated region
  $region30: #{tpu_custom_call.1} parent=0 // pred_check
    _
  $region31: #{tpu_custom_call.1} parent=0 // pred_check_branch
    %36 = sbr.rel (0) target = $region33
  $region32: #{tpu_custom_call.1} parent=0 // pred_region
    _
  $region33: #{tpu_custom_call.1} parent=0 // pred_fallthru
    _
  // Predicated region
  $region34: #{tpu_custom_call.1} parent=0 // pred_check
    _
  $region35: #{tpu_custom_call.1} parent=0 // pred_check_branch
    %38 = sbr.rel (0) target = $region37
  $region36: #{tpu_custom_call.1} parent=0 // pred_region
    _
  $region37: #{tpu_custom_call.1} parent=0 // pred_fallthru
    _
  // Predicated region
  $region38: #{tpu_custom_call.1} parent=0 // pred_check
    _
  $region39: #{tpu_custom_call.1} parent=0 // pred_check_branch
    %40 = sbr.rel (0) target = $region41
  $region40: #{tpu_custom_call.1} parent=0 // pred_region
    _
  $region41: #{tpu_custom_call.1} parent=0 // pred_fallthru
    _
  // Predicated region
  $region42: #{tpu_custom_call.1} parent=0 // pred_check
    _
  $region43: #{tpu_custom_call.1} parent=0 // pred_check_branch
    %42 = sbr.rel (0) target = $region45
  $region44: #{tpu_custom_call.1} parent=0 // pred_region
    _
  $region45: #{tpu_custom_call.1} parent=0 // pred_fallthru
    _
  // Predicated region
  $region46: #{tpu_custom_call.1} parent=0 // pred_check
    _
  $region47: #{tpu_custom_call.1} parent=0 // pred_check_branch
    %44 = sbr.rel (0) target = $region49
  $region48: #{tpu_custom_call.1} parent=0 // pred_region
    _
  $region49: #{tpu_custom_call.1} parent=0 // pred_fallthru
    _
  // Predicated region
  $region50: #{tpu_custom_call.1} parent=0 // pred_check
    _
  $region51: #{tpu_custom_call.1} parent=0 // pred_check_branch
    %46 = sbr.rel (0) target = $region53
  $region52: #{tpu_custom_call.1} parent=0 // pred_region
    _
  $region53: #{tpu_custom_call.1} parent=0 // pred_fallthru
    _
  // Predicated region
  $region54: #{tpu_custom_call.1} parent=0 // pred_check
    _
  $region55: #{tpu_custom_call.1} parent=0 // pred_check_branch
    %48 = sbr.rel (0) target = $region57
  $region56: #{tpu_custom_call.1} parent=0 // pred_region
    _
  $region57: #{tpu_custom_call.1} parent=0 // pred_fallthru
    _
  // Predicated region
  $region58: #{tpu_custom_call.1} parent=0 // pred_check
    _
  $region59: #{tpu_custom_call.1} parent=0 // pred_check_branch
    %50 = sbr.rel (0) target = $region61
  $region60: #{tpu_custom_call.1} parent=0 // pred_region
    _
  $region61: #{tpu_custom_call.1} parent=0 // pred_fallthru
    _
  // Predicated region
  $region62: #{tpu_custom_call.1} parent=0 // pred_check
    _
  $region63: #{tpu_custom_call.1} parent=0 // pred_check_branch
    %52 = sbr.rel (0) target = $region65
  $region64: #{tpu_custom_call.1} parent=0 // pred_region
    _
  $region65: #{tpu_custom_call.1} parent=0 // pred_fallthru
    _
  %v54 = vld [vmem:[%s0] sm:$0xff]
  %v55 = vld [vmem:[%s0 + $0x8] sm:$0xff]
  %v56 = vld [vmem:[%s0 + $0x10] sm:$0xff]
  %v57 = vld [vmem:[%s0 + $0x18] sm:$0xff]
  %v58 = vpack.c.bf16 %v55, %v54
  %v59 = vpack.c.bf16 %v57, %v56
  %v60 = vld [vmem:[%s1] sm:$0xff]
  %v61 = vld [vmem:[%s1 + $0x8] sm:$0xff]
  %v62 = vld [vmem:[%s2] sm:$0x3]
  %v64 = vlaneseq
  %v65 = vshrl.u32 %v64, 7
  %v66 = vsub.s32 0, %v65
  %v67 = vrot.slane %v62, %v66
  %v68 = vlaneseq
  %v69 = vshrl.u32 %v68, 7
  %v70 = vsub.s32 1, %v69
  %v71 = vrot.slane %v62, %v70
  %v76 = vunpack.c.l.b16 %v60
  %v77 = vunpack.c.h.b16 %v60
  %v78 = vunpack.c.l.b16 %v61
  %v79 = vunpack.c.h.b16 %v61
  %v80 = vpack.c.b16 %v78, %v76
  %v81 = vpack.c.b16 %v79, %v77
  %vm84 = vcmask 130048
  %v86 = vsel %vm84, %v58, 0
  %v89 = vsel %vm84, %v59, 0
  %91 = vmatprep.subr.bf16.mxu0 %v81
  %92 = vmatpush1.bf16.msra.mxu0 %v80
  %93 = vmatprep.subr.bf16.mxu0 0
  %94 = vmatpush1.bf16.msra.mxu0 0
  %95 = vmatprep.subr.bf16.mxu0 0
  %96 = vmatpush1.bf16.msra.mxu0 0
  %97 = vmatprep.subr.bf16.mxu0 0
  %98 = vmatpush1.bf16.msra.mxu0 0
  %99 = vmatprep.subr.bf16.mxu0 0
  %100 = vmatpush1.bf16.msra.mxu0 0
  %101 = vmatprep.subr.bf16.mxu0 0
  %102 = vmatpush1.bf16.msra.mxu0 0
  %103 = vmatprep.subr.bf16.mxu0 0
  %104 = vmatpush1.bf16.msra.mxu0 0
  %105 = vmatprep.subr.bf16.mxu0 0
  %106 = vmatpush1.bf16.msra.mxu0 0
  %107 = vmatprep.subr.bf16.mxu0 0
  %108 = vmatpush1.bf16.msra.mxu0 0
  %109 = vmatprep.subr.bf16.mxu0 0
  %110 = vmatpush1.bf16.msra.mxu0 0
  %111 = vmatprep.subr.bf16.mxu0 0
  %112 = vmatpush1.bf16.msra.mxu0 0
  %113 = vmatprep.subr.bf16.mxu0 0
  %114 = vmatpush1.bf16.msra.mxu0 0
  %115 = vmatprep.subr.bf16.mxu0 0
  %116 = vmatpush1.bf16.msra.mxu0 0
  %117 = vmatprep.subr.bf16.mxu0 0
  %118 = vmatpush1.bf16.msra.mxu0 0
  %119 = vmatprep.subr.bf16.mxu0 0
  %120 = vmatpush1.bf16.msra.mxu0 0
  %121 = vmatprep.subr.bf16.mxu0 0
  %122 = vmatpush1.bf16.msra.mxu0 0
  %123 = vmatprep.mubr.bf16.mxu0 0
  %124 = vmatmul.mubr.bf16.gmra.mrb[0].mxu0 %v86
  %v125 = vpop.f32.mrb[0].mxu0
  %v126 = vadd.f32 %v67, %v125
  %v127 = vpop.f32.mrb[0].mxu0
  %v128 = vadd.f32 %v71, %v127
  %v129 = vpop.f32.mrb[0].mxu0
  %v130 = vadd.f32 %v67, %v129
  %v131 = vpop.f32.mrb[0].mxu0
  %v132 = vadd.f32 %v71, %v131
  %133 = vmatprep.mubr.bf16.mxu0 0
  %134 = vmatmul.mubr.bf16.gmra.mrb[0].mxu0 %v89
  %v135 = vpop.f32.mrb[0].mxu0
  %v136 = vadd.f32 %v67, %v135
  %v137 = vpop.f32.mrb[0].mxu0
  %v138 = vadd.f32 %v71, %v137
  %v139 = vpop.f32.mrb[0].mxu0
  %v140 = vadd.f32 %v67, %v139
  %v141 = vpop.f32.mrb[0].mxu0
  %v142 = vadd.f32 %v71, %v141
  %143 = vdwg.mxu0
  %v144 = vpack.c.bf16 %v130, %v126
  %v145 = vpack.c.bf16 %v132, %v128
  %v146 = vpack.c.bf16 %v140, %v136
  %v147 = vpack.c.bf16 %v142, %v138
  %v148 = vld [vmem:[%s5] sm:$0xf]
  %v149 = vld [vmem:[%s5 + $0x4] sm:$0xf]
  %v150 = vld [vmem:[%s5 + $0x8] sm:$0xf]
  %v151 = vld [vmem:[%s5 + $0xc] sm:$0xf]
  %v152 = vld [vmem:[%s5 + $0x10] sm:$0xf]
  %v153 = vld [vmem:[%s5 + $0x14] sm:$0xf]
  %v154 = vld [vmem:[%s5 + $0x18] sm:$0xf]
  %v155 = vld [vmem:[%s5 + $0x1c] sm:$0xf]
  %v156 = vld [vmem:[%s5 + $0x20] sm:$0xf]
  %v157 = vld [vmem:[%s5 + $0x24] sm:$0xf]
  %v158 = vld [vmem:[%s5 + $0x28] sm:$0xf]
  %v159 = vld [vmem:[%s5 + $0x2c] sm:$0xf]
  %v160 = vld [vmem:[%s5 + $0x30] sm:$0xf]
  %v161 = vld [vmem:[%s5 + $0x34] sm:$0xf]
  %v162 = vld [vmem:[%s5 + $0x38] sm:$0xf]
  %v163 = vld [vmem:[%s5 + $0x3c] sm:$0xf]
  %v164 = vld [vmem:[%s5 + $0x40] sm:$0xf]
  %v165 = vld [vmem:[%s5 + $0x44] sm:$0xf]
  %v166 = vld [vmem:[%s5 + $0x48] sm:$0xf]
  %v167 = vld [vmem:[%s5 + $0x4c] sm:$0xf]
  %v168 = vld [vmem:[%s5 + $0x50] sm:$0xf]
  %v169 = vld [vmem:[%s5 + $0x54] sm:$0xf]
  %v170 = vld [vmem:[%s5 + $0x58] sm:$0xf]
  %v171 = vld [vmem:[%s5 + $0x5c] sm:$0xf]
  %v172 = vld [vmem:[%s5 + $0x60] sm:$0xf]
  %v173 = vld [vmem:[%s5 + $0x64] sm:$0xf]
  %v174 = vld [vmem:[%s5 + $0x68] sm:$0xf]
  %v175 = vld [vmem:[%s5 + $0x6c] sm:$0xf]
  %v176 = vld [vmem:[%s5 + $0x70] sm:$0xf]
  %v177 = vld [vmem:[%s5 + $0x74] sm:$0xf]
  %v178 = vld [vmem:[%s5 + $0x78] sm:$0xf]
  %v179 = vld [vmem:[%s5 + $0x7c] sm:$0xf]
  %v180 = vld [vmem:[%s3] sm:$0xf]
  %v181 = vld [vmem:[%s3 + $0x4] sm:$0xf]
  %v182 = vld [vmem:[%s3 + $0x8] sm:$0xf]
  %v183 = vld [vmem:[%s3 + $0xc] sm:$0xf]
  %v184 = vld [vmem:[%s3 + $0x10] sm:$0xf]
  %v185 = vld [vmem:[%s3 + $0x14] sm:$0xf]
  %v186 = vld [vmem:[%s3 + $0x18] sm:$0xf]
  %v187 = vld [vmem:[%s3 + $0x1c] sm:$0xf]
  %v188 = vld [vmem:[%s3 + $0x20] sm:$0xf]
  %v189 = vld [vmem:[%s3 + $0x24] sm:$0xf]
  %v190 = vld [vmem:[%s3 + $0x28] sm:$0xf]
  %v191 = vld [vmem:[%s3 + $0x2c] sm:$0xf]
  %v192 = vld [vmem:[%s3 + $0x30] sm:$0xf]
  %v193 = vld [vmem:[%s3 + $0x34] sm:$0xf]
  %v194 = vld [vmem:[%s3 + $0x38] sm:$0xf]
  %v195 = vld [vmem:[%s3 + $0x3c] sm:$0xf]
  %v196 = vld [vmem:[%s3 + $0x40] sm:$0xf]
  %v197 = vld [vmem:[%s3 + $0x44] sm:$0xf]
  %v198 = vld [vmem:[%s3 + $0x48] sm:$0xf]
  %v199 = vld [vmem:[%s3 + $0x4c] sm:$0xf]
  %v200 = vld [vmem:[%s3 + $0x50] sm:$0xf]
  %v201 = vld [vmem:[%s3 + $0x54] sm:$0xf]
  %v202 = vld [vmem:[%s3 + $0x58] sm:$0xf]
  %v203 = vld [vmem:[%s3 + $0x5c] sm:$0xf]
  %v204 = vld [vmem:[%s3 + $0x60] sm:$0xf]
  %v205 = vld [vmem:[%s3 + $0x64] sm:$0xf]
  %v206 = vld [vmem:[%s3 + $0x68] sm:$0xf]
  %v207 = vld [vmem:[%s3 + $0x6c] sm:$0xf]
  %v208 = vld [vmem:[%s3 + $0x70] sm:$0xf]
  %v209 = vld [vmem:[%s3 + $0x74] sm:$0xf]
  %v210 = vld [vmem:[%s3 + $0x78] sm:$0xf]
  %v211 = vld [vmem:[%s3 + $0x7c] sm:$0xf]
  %v244 = vunpack.c.l.b16 %v148
  %v245 = vunpack.c.l.b16 %v149
  %v246 = vunpack.c.l.b16 %v150
  %v247 = vunpack.c.l.b16 %v151
  %v248 = vunpack.c.l.b16 %v152
  %v249 = vunpack.c.l.b16 %v153
  %v250 = vunpack.c.l.b16 %v154
  %v251 = vunpack.c.l.b16 %v155
  %v252 = vunpack.c.l.b16 %v156
  %v253 = vunpack.c.l.b16 %v157
  %v254 = vunpack.c.l.b16 %v158
  %v255 = vunpack.c.l.b16 %v159
  %v256 = vunpack.c.l.b16 %v160
  %v257 = vunpack.c.l.b16 %v161
  %v258 = vunpack.c.l.b16 %v162
  %v259 = vunpack.c.l.b16 %v163
  %v260 = vunpack.c.l.b16 %v164
  %v261 = vunpack.c.l.b16 %v165
  %v262 = vunpack.c.l.b16 %v166
  %v263 = vunpack.c.l.b16 %v167
  %v264 = vunpack.c.l.b16 %v168
  %v265 = vunpack.c.l.b16 %v169
  %v266 = vunpack.c.l.b16 %v170
  %v267 = vunpack.c.l.b16 %v171
  %v268 = vunpack.c.l.b16 %v172
  %v269 = vunpack.c.l.b16 %v173
  %v270 = vunpack.c.l.b16 %v174
  %v271 = vunpack.c.l.b16 %v175
  %v272 = vunpack.c.l.b16 %v176
  %v273 = vunpack.c.l.b16 %v177
  %v274 = vunpack.c.l.b16 %v178
  %v275 = vunpack.c.l.b16 %v179
  %v276 = vpack.c.b16 %v245, %v244
  %v277 = vpack.c.b16 %v247, %v246
  %v278 = vpack.c.b16 %v249, %v248
  %v279 = vpack.c.b16 %v251, %v250
  %v280 = vpack.c.b16 %v253, %v252
  %v281 = vpack.c.b16 %v255, %v254
  %v282 = vpack.c.b16 %v257, %v256
  %v283 = vpack.c.b16 %v259, %v258
  %v284 = vpack.c.b16 %v261, %v260
  %v285 = vpack.c.b16 %v263, %v262
  %v286 = vpack.c.b16 %v265, %v264
  %v287 = vpack.c.b16 %v267, %v266
  %v288 = vpack.c.b16 %v269, %v268
  %v289 = vpack.c.b16 %v271, %v270
  %v290 = vpack.c.b16 %v273, %v272
  %v291 = vpack.c.b16 %v275, %v274
  %308 = vmatprep.subr.bf16.mxu0 0
  %309 = vmatpush1.bf16.msra.mxu0 %v276
  %310 = vmatprep.subr.bf16.mxu0 0
  %311 = vmatpush1.bf16.msra.mxu0 %v277
  %312 = vmatprep.subr.bf16.mxu0 0
  %313 = vmatpush1.bf16.msra.mxu0 %v278
  %314 = vmatprep.subr.bf16.mxu0 0
  %315 = vmatpush1.bf16.msra.mxu0 %v279
  %316 = vmatprep.subr.bf16.mxu0 0
  %317 = vmatpush1.bf16.msra.mxu0 %v280
  %318 = vmatprep.subr.bf16.mxu0 0
  %319 = vmatpush1.bf16.msra.mxu0 %v281
  %320 = vmatprep.subr.bf16.mxu0 0
  %321 = vmatpush1.bf16.msra.mxu0 %v282
  %322 = vmatprep.subr.bf16.mxu0 0
  %323 = vmatpush1.bf16.msra.mxu0 %v283
  %324 = vmatprep.subr.bf16.mxu0 0
  %325 = vmatpush1.bf16.msra.mxu0 %v284
  %326 = vmatprep.subr.bf16.mxu0 0
  %327 = vmatpush1.bf16.msra.mxu0 %v285
  %328 = vmatprep.subr.bf16.mxu0 0
  %329 = vmatpush1.bf16.msra.mxu0 %v286
  %330 = vmatprep.subr.bf16.mxu0 0
  %331 = vmatpush1.bf16.msra.mxu0 %v287
  %332 = vmatprep.subr.bf16.mxu0 0
  %333 = vmatpush1.bf16.msra.mxu0 %v288
  %334 = vmatprep.subr.bf16.mxu0 0
  %335 = vmatpush1.bf16.msra.mxu0 %v289
  %336 = vmatprep.subr.bf16.mxu0 0
  %337 = vmatpush1.bf16.msra.mxu0 %v290
  %338 = vmatprep.subr.bf16.mxu0 0
  %339 = vmatpush1.bf16.msra.mxu0 %v291
  %340 = vmatprep.mubr.bf16.mxu0 %v145
  %341 = vmatmul.mubr.bf16.gmra.mrb[0].mxu0 %v144
  %v342 = vpop.f32.mrb[0].mxu0
  %v343 = vadd.f32 0.0, %v342
  %v344 = vpop.f32.mrb[0].mxu0
  %v345 = vpop.f32.mrb[0].mxu0
  %v346 = vpop.f32.mrb[0].mxu0
  %347 = vdwg.mxu0
  %v348 = vld [vmem:[%s6] sm:$0xf]
  %v349 = vld [vmem:[%s6 + $0x4] sm:$0xf]
  %v350 = vld [vmem:[%s6 + $0x8] sm:$0xf]
  %v351 = vld [vmem:[%s6 + $0xc] sm:$0xf]
  %v352 = vld [vmem:[%s6 + $0x10] sm:$0xf]
  %v353 = vld [vmem:[%s6 + $0x14] sm:$0xf]
  %v354 = vld [vmem:[%s6 + $0x18] sm:$0xf]
  %v355 = vld [vmem:[%s6 + $0x1c] sm:$0xf]
  %v356 = vld [vmem:[%s6 + $0x20] sm:$0xf]
  %v357 = vld [vmem:[%s6 + $0x24] sm:$0xf]
  %v358 = vld [vmem:[%s6 + $0x28] sm:$0xf]
  %v359 = vld [vmem:[%s6 + $0x2c] sm:$0xf]
  %v360 = vld [vmem:[%s6 + $0x30] sm:$0xf]
  %v361 = vld [vmem:[%s6 + $0x34] sm:$0xf]
  %v362 = vld [vmem:[%s6 + $0x38] sm:$0xf]
  %v363 = vld [vmem:[%s6 + $0x3c] sm:$0xf]
  %v364 = vld [vmem:[%s6 + $0x40] sm:$0xf]
  %v365 = vld [vmem:[%s6 + $0x44] sm:$0xf]
  %v366 = vld [vmem:[%s6 + $0x48] sm:$0xf]
  %v367 = vld [vmem:[%s6 + $0x4c] sm:$0xf]
  %v368 = vld [vmem:[%s6 + $0x50] sm:$0xf]
  %v369 = vld [vmem:[%s6 + $0x54] sm:$0xf]
  %v370 = vld [vmem:[%s6 + $0x58] sm:$0xf]
  %v371 = vld [vmem:[%s6 + $0x5c] sm:$0xf]
  %v372 = vld [vmem:[%s6 + $0x60] sm:$0xf]
  %v373 = vld [vmem:[%s6 + $0x64] sm:$0xf]
  %v374 = vld [vmem:[%s6 + $0x68] sm:$0xf]
  %v375 = vld [vmem:[%s6 + $0x6c] sm:$0xf]
  %v376 = vld [vmem:[%s6 + $0x70] sm:$0xf]
  %v377 = vld [vmem:[%s6 + $0x74] sm:$0xf]
  %v378 = vld [vmem:[%s6 + $0x78] sm:$0xf]
  %v379 = vld [vmem:[%s6 + $0x7c] sm:$0xf]
  %v412 = vunpack.c.l.b16 %v348
  %v413 = vunpack.c.l.b16 %v349
  %v414 = vunpack.c.l.b16 %v350
  %v415 = vunpack.c.l.b16 %v351
  %v416 = vunpack.c.l.b16 %v352
  %v417 = vunpack.c.l.b16 %v353
  %v418 = vunpack.c.l.b16 %v354
  %v419 = vunpack.c.l.b16 %v355
  %v420 = vunpack.c.l.b16 %v356
  %v421 = vunpack.c.l.b16 %v357
  %v422 = vunpack.c.l.b16 %v358
  %v423 = vunpack.c.l.b16 %v359
  %v424 = vunpack.c.l.b16 %v360
  %v425 = vunpack.c.l.b16 %v361
  %v426 = vunpack.c.l.b16 %v362
  %v427 = vunpack.c.l.b16 %v363
  %v428 = vunpack.c.l.b16 %v364
  %v429 = vunpack.c.l.b16 %v365
  %v430 = vunpack.c.l.b16 %v366
  %v431 = vunpack.c.l.b16 %v367
  %v432 = vunpack.c.l.b16 %v368
  %v433 = vunpack.c.l.b16 %v369
  %v434 = vunpack.c.l.b16 %v370
  %v435 = vunpack.c.l.b16 %v371
  %v436 = vunpack.c.l.b16 %v372
  %v437 = vunpack.c.l.b16 %v373
  %v438 = vunpack.c.l.b16 %v374
  %v439 = vunpack.c.l.b16 %v375
  %v440 = vunpack.c.l.b16 %v376
  %v441 = vunpack.c.l.b16 %v377
  %v442 = vunpack.c.l.b16 %v378
  %v443 = vunpack.c.l.b16 %v379
  %v444 = vpack.c.b16 %v413, %v412
  %v445 = vpack.c.b16 %v415, %v414
  %v446 = vpack.c.b16 %v417, %v416
  %v447 = vpack.c.b16 %v419, %v418
  %v448 = vpack.c.b16 %v421, %v420
  %v449 = vpack.c.b16 %v423, %v422
  %v450 = vpack.c.b16 %v425, %v424
  %v451 = vpack.c.b16 %v427, %v426
  %v452 = vpack.c.b16 %v429, %v428
  %v453 = vpack.c.b16 %v431, %v430
  %v454 = vpack.c.b16 %v433, %v432
  %v455 = vpack.c.b16 %v435, %v434
  %v456 = vpack.c.b16 %v437, %v436
  %v457 = vpack.c.b16 %v439, %v438
  %v458 = vpack.c.b16 %v441, %v440
  %v459 = vpack.c.b16 %v443, %v442
  %476 = vmatprep.subr.bf16.mxu0 0
  %477 = vmatpush1.bf16.msra.mxu0 %v444
  %478 = vmatprep.subr.bf16.mxu0 0
  %479 = vmatpush1.bf16.msra.mxu0 %v445
  %480 = vmatprep.subr.bf16.mxu0 0
  %481 = vmatpush1.bf16.msra.mxu0 %v446
  %482 = vmatprep.subr.bf16.mxu0 0
  %483 = vmatpush1.bf16.msra.mxu0 %v447
  %484 = vmatprep.subr.bf16.mxu0 0
  %485 = vmatpush1.bf16.msra.mxu0 %v448
  %486 = vmatprep.subr.bf16.mxu0 0
  %487 = vmatpush1.bf16.msra.mxu0 %v449
  %488 = vmatprep.subr.bf16.mxu0 0
  %489 = vmatpush1.bf16.msra.mxu0 %v450
  %490 = vmatprep.subr.bf16.mxu0 0
  %491 = vmatpush1.bf16.msra.mxu0 %v451
  %492 = vmatprep.subr.bf16.mxu0 0
  %493 = vmatpush1.bf16.msra.mxu0 %v452
  %494 = vmatprep.subr.bf16.mxu0 0
  %495 = vmatpush1.bf16.msra.mxu0 %v453
  %496 = vmatprep.subr.bf16.mxu0 0
  %497 = vmatpush1.bf16.msra.mxu0 %v454
  %498 = vmatprep.subr.bf16.mxu0 0
  %499 = vmatpush1.bf16.msra.mxu0 %v455
  %500 = vmatprep.subr.bf16.mxu0 0
  %501 = vmatpush1.bf16.msra.mxu0 %v456
  %502 = vmatprep.subr.bf16.mxu0 0
  %503 = vmatpush1.bf16.msra.mxu0 %v457
  %504 = vmatprep.subr.bf16.mxu0 0
  %505 = vmatpush1.bf16.msra.mxu0 %v458
  %506 = vmatprep.subr.bf16.mxu0 0
  %507 = vmatpush1.bf16.msra.mxu0 %v459
  %508 = vmatprep.mubr.bf16.mxu0 %v145
  %509 = vmatmul.mubr.bf16.gmra.mrb[0].mxu0 %v144
  %v510 = vpop.f32.mrb[0].mxu0
  %v511 = vadd.f32 0.0, %v510
  %v512 = vpop.f32.mrb[0].mxu0
  %v513 = vpop.f32.mrb[0].mxu0
  %v514 = vpop.f32.mrb[0].mxu0
  %515 = vdwg.mxu0
  %s516 = scalar_lea.vmem %s3, 128
  %v517 = vld [vmem:[%s516] sm:$0xf]
  %v518 = vld [vmem:[%s516 + $0x4] sm:$0xf]
  %v519 = vld [vmem:[%s516 + $0x8] sm:$0xf]
  %v520 = vld [vmem:[%s516 + $0xc] sm:$0xf]
  %v521 = vld [vmem:[%s516 + $0x10] sm:$0xf]
  %v522 = vld [vmem:[%s516 + $0x14] sm:$0xf]
  %v523 = vld [vmem:[%s516 + $0x18] sm:$0xf]
  %v524 = vld [vmem:[%s516 + $0x1c] sm:$0xf]
  %v525 = vld [vmem:[%s516 + $0x20] sm:$0xf]
  %v526 = vld [vmem:[%s516 + $0x24] sm:$0xf]
  %v527 = vld [vmem:[%s516 + $0x28] sm:$0xf]
  %v528 = vld [vmem:[%s516 + $0x2c] sm:$0xf]
  %v529 = vld [vmem:[%s516 + $0x30] sm:$0xf]
  %v530 = vld [vmem:[%s516 + $0x34] sm:$0xf]
  %v531 = vld [vmem:[%s516 + $0x38] sm:$0xf]
  %v532 = vld [vmem:[%s516 + $0x3c] sm:$0xf]
  %v533 = vld [vmem:[%s516 + $0x40] sm:$0xf]
  %v534 = vld [vmem:[%s516 + $0x44] sm:$0xf]
  %v535 = vld [vmem:[%s516 + $0x48] sm:$0xf]
  %v536 = vld [vmem:[%s516 + $0x4c] sm:$0xf]
  %v537 = vld [vmem:[%s516 + $0x50] sm:$0xf]
  %v538 = vld [vmem:[%s516 + $0x54] sm:$0xf]
  %v539 = vld [vmem:[%s516 + $0x58] sm:$0xf]
  %v540 = vld [vmem:[%s516 + $0x5c] sm:$0xf]
  %v541 = vld [vmem:[%s516 + $0x60] sm:$0xf]
  %v542 = vld [vmem:[%s516 + $0x64] sm:$0xf]
  %v543 = vld [vmem:[%s516 + $0x68] sm:$0xf]
  %v544 = vld [vmem:[%s516 + $0x6c] sm:$0xf]
  %v545 = vld [vmem:[%s516 + $0x70] sm:$0xf]
  %v546 = vld [vmem:[%s516 + $0x74] sm:$0xf]
  %v547 = vld [vmem:[%s516 + $0x78] sm:$0xf]
  %v548 = vld [vmem:[%s516 + $0x7c] sm:$0xf]
  %v551 = vrot.slane %v144, 4
  %v552 = vrot.slane %v145, 4
  %v587 = vunpack.c.l.b16 %v517
  %v588 = vunpack.c.l.b16 %v518
  %v589 = vunpack.c.l.b16 %v519
  %v590 = vunpack.c.l.b16 %v520
  %v591 = vunpack.c.l.b16 %v521
  %v592 = vunpack.c.l.b16 %v522
  %v593 = vunpack.c.l.b16 %v523
  %v594 = vunpack.c.l.b16 %v524
  %v595 = vunpack.c.l.b16 %v525
  %v596 = vunpack.c.l.b16 %v526
  %v597 = vunpack.c.l.b16 %v527
  %v598 = vunpack.c.l.b16 %v528
  %v599 = vunpack.c.l.b16 %v529
  %v600 = vunpack.c.l.b16 %v530
  %v601 = vunpack.c.l.b16 %v531
  %v602 = vunpack.c.l.b16 %v532
  %v603 = vunpack.c.l.b16 %v533
  %v604 = vunpack.c.l.b16 %v534
  %v605 = vunpack.c.l.b16 %v535
  %v606 = vunpack.c.l.b16 %v536
  %v607 = vunpack.c.l.b16 %v537
  %v608 = vunpack.c.l.b16 %v538
  %v609 = vunpack.c.l.b16 %v539
  %v610 = vunpack.c.l.b16 %v540
  %v611 = vunpack.c.l.b16 %v541
  %v612 = vunpack.c.l.b16 %v542
  %v613 = vunpack.c.l.b16 %v543
  %v614 = vunpack.c.l.b16 %v544
  %v615 = vunpack.c.l.b16 %v545
  %v616 = vunpack.c.l.b16 %v546
  %v617 = vunpack.c.l.b16 %v547
  %v618 = vunpack.c.l.b16 %v548
  %v619 = vpack.c.b16 %v588, %v587
  %v620 = vpack.c.b16 %v590, %v589
  %v621 = vpack.c.b16 %v592, %v591
  %v622 = vpack.c.b16 %v594, %v593
  %v623 = vpack.c.b16 %v596, %v595
  %v624 = vpack.c.b16 %v598, %v597
  %v625 = vpack.c.b16 %v600, %v599
  %v626 = vpack.c.b16 %v602, %v601
  %v627 = vpack.c.b16 %v604, %v603
  %v628 = vpack.c.b16 %v606, %v605
  %v629 = vpack.c.b16 %v608, %v607
  %v630 = vpack.c.b16 %v610, %v609
  %v631 = vpack.c.b16 %v612, %v611
  %v632 = vpack.c.b16 %v614, %v613
  %v633 = vpack.c.b16 %v616, %v615
  %v634 = vpack.c.b16 %v618, %v617
  %651 = vmatprep.subr.bf16.mxu0 0
  %652 = vmatpush1.bf16.msra.mxu0 %v619
  %653 = vmatprep.subr.bf16.mxu0 0
  %654 = vmatpush1.bf16.msra.mxu0 %v620
  %655 = vmatprep.subr.bf16.mxu0 0
  %656 = vmatpush1.bf16.msra.mxu0 %v621
  %657 = vmatprep.subr.bf16.mxu0 0
  %658 = vmatpush1.bf16.msra.mxu0 %v622
  %659 = vmatprep.subr.bf16.mxu0 0
  %660 = vmatpush1.bf16.msra.mxu0 %v623
  %661 = vmatprep.subr.bf16.mxu0 0
  %662 = vmatpush1.bf16.msra.mxu0 %v624
  %663 = vmatprep.subr.bf16.mxu0 0
  %664 = vmatpush1.bf16.msra.mxu0 %v625
  %665 = vmatprep.subr.bf16.mxu0 0
  %666 = vmatpush1.bf16.msra.mxu0 %v626
  %667 = vmatprep.subr.bf16.mxu0 0
  %668 = vmatpush1.bf16.msra.mxu0 %v627
  %669 = vmatprep.subr.bf16.mxu0 0
  %670 = vmatpush1.bf16.msra.mxu0 %v628
  %671 = vmatprep.subr.bf16.mxu0 0
  %672 = vmatpush1.bf16.msra.mxu0 %v629
  %673 = vmatprep.subr.bf16.mxu0 0
  %674 = vmatpush1.bf16.msra.mxu0 %v630
  %675 = vmatprep.subr.bf16.mxu0 0
  %676 = vmatpush1.bf16.msra.mxu0 %v631
  %677 = vmatprep.subr.bf16.mxu0 0
  %678 = vmatpush1.bf16.msra.mxu0 %v632
  %679 = vmatprep.subr.bf16.mxu0 0
  %680 = vmatpush1.bf16.msra.mxu0 %v633
  %681 = vmatprep.subr.bf16.mxu0 0
  %682 = vmatpush1.bf16.msra.mxu0 %v634
  %683 = vmatprep.mubr.bf16.mxu0 %v552
  %684 = vmatmul.mubr.bf16.gmra.mrb[0].mxu0 %v551
  %v685 = vpop.f32.mrb[0].mxu0
  %v686 = vadd.f32 0.0, %v685
  %v687 = vpop.f32.mrb[0].mxu0
  %v688 = vpop.f32.mrb[0].mxu0
  %v689 = vpop.f32.mrb[0].mxu0
  %690 = vdwg.mxu0
  %v723 = vunpack.c.l.b16 %v180
  %v724 = vunpack.c.l.b16 %v181
  %v725 = vunpack.c.l.b16 %v182
  %v726 = vunpack.c.l.b16 %v183
  %v727 = vunpack.c.l.b16 %v184
  %v728 = vunpack.c.l.b16 %v185
  %v729 = vunpack.c.l.b16 %v186
  %v730 = vunpack.c.l.b16 %v187
  %v731 = vunpack.c.l.b16 %v188
  %v732 = vunpack.c.l.b16 %v189
  %v733 = vunpack.c.l.b16 %v190
  %v734 = vunpack.c.l.b16 %v191
  %v735 = vunpack.c.l.b16 %v192
  %v736 = vunpack.c.l.b16 %v193
  %v737 = vunpack.c.l.b16 %v194
  %v738 = vunpack.c.l.b16 %v195
  %v739 = vunpack.c.l.b16 %v196
  %v740 = vunpack.c.l.b16 %v197
  %v741 = vunpack.c.l.b16 %v198
  %v742 = vunpack.c.l.b16 %v199
  %v743 = vunpack.c.l.b16 %v200
  %v744 = vunpack.c.l.b16 %v201
  %v745 = vunpack.c.l.b16 %v202
  %v746 = vunpack.c.l.b16 %v203
  %v747 = vunpack.c.l.b16 %v204
  %v748 = vunpack.c.l.b16 %v205
  %v749 = vunpack.c.l.b16 %v206
  %v750 = vunpack.c.l.b16 %v207
  %v751 = vunpack.c.l.b16 %v208
  %v752 = vunpack.c.l.b16 %v209
  %v753 = vunpack.c.l.b16 %v210
  %v754 = vunpack.c.l.b16 %v211
  %v755 = vpack.c.b16 %v724, %v723
  %v756 = vpack.c.b16 %v726, %v725
  %v757 = vpack.c.b16 %v728, %v727
  %v758 = vpack.c.b16 %v730, %v729
  %v759 = vpack.c.b16 %v732, %v731
  %v760 = vpack.c.b16 %v734, %v733
  %v761 = vpack.c.b16 %v736, %v735
  %v762 = vpack.c.b16 %v738, %v737
  %v763 = vpack.c.b16 %v740, %v739
  %v764 = vpack.c.b16 %v742, %v741
  %v765 = vpack.c.b16 %v744, %v743
  %v766 = vpack.c.b16 %v746, %v745
  %v767 = vpack.c.b16 %v748, %v747
  %v768 = vpack.c.b16 %v750, %v749
  %v769 = vpack.c.b16 %v752, %v751
  %v770 = vpack.c.b16 %v754, %v753
  %787 = vmatprep.subr.bf16.mxu0 0
  %788 = vmatpush1.bf16.msra.mxu0 %v755
  %789 = vmatprep.subr.bf16.mxu0 0
  %790 = vmatpush1.bf16.msra.mxu0 %v756
  %791 = vmatprep.subr.bf16.mxu0 0
  %792 = vmatpush1.bf16.msra.mxu0 %v757
  %793 = vmatprep.subr.bf16.mxu0 0
  %794 = vmatpush1.bf16.msra.mxu0 %v758
  %795 = vmatprep.subr.bf16.mxu0 0
  %796 = vmatpush1.bf16.msra.mxu0 %v759
  %797 = vmatprep.subr.bf16.mxu0 0
  %798 = vmatpush1.bf16.msra.mxu0 %v760
  %799 = vmatprep.subr.bf16.mxu0 0
  %800 = vmatpush1.bf16.msra.mxu0 %v761
  %801 = vmatprep.subr.bf16.mxu0 0
  %802 = vmatpush1.bf16.msra.mxu0 %v762
  %803 = vmatprep.subr.bf16.mxu0 0
  %804 = vmatpush1.bf16.msra.mxu0 %v763
  %805 = vmatprep.subr.bf16.mxu0 0
  %806 = vmatpush1.bf16.msra.mxu0 %v764
  %807 = vmatprep.subr.bf16.mxu0 0
  %808 = vmatpush1.bf16.msra.mxu0 %v765
  %809 = vmatprep.subr.bf16.mxu0 0
  %810 = vmatpush1.bf16.msra.mxu0 %v766
  %811 = vmatprep.subr.bf16.mxu0 0
  %812 = vmatpush1.bf16.msra.mxu0 %v767
  %813 = vmatprep.subr.bf16.mxu0 0
  %814 = vmatpush1.bf16.msra.mxu0 %v768
  %815 = vmatprep.subr.bf16.mxu0 0
  %816 = vmatpush1.bf16.msra.mxu0 %v769
  %817 = vmatprep.subr.bf16.mxu0 0
  %818 = vmatpush1.bf16.msra.mxu0 %v770
  %819 = vmatprep.mubr.bf16.mxu0 %v145
  %820 = vmatmul.mubr.bf16.gmra.mrb[0].mxu0 %v144
  %v821 = vpop.f32.mrb[0].mxu0
  %v822 = vadd.f32 %v686, %v821
  %v823 = vpop.f32.mrb[0].mxu0
  %v824 = vpop.f32.mrb[0].mxu0
  %v825 = vpop.f32.mrb[0].mxu0
  %826 = vdwg.mxu0
  %827 = vmatprep.subr.bf16.mxu0 0
  %828 = vmatpush1.bf16.msra.mxu0 %v276
  %829 = vmatprep.subr.bf16.mxu0 0
  %830 = vmatpush1.bf16.msra.mxu0 %v277
  %831 = vmatprep.subr.bf16.mxu0 0
  %832 = vmatpush1.bf16.msra.mxu0 %v278
  %833 = vmatprep.subr.bf16.mxu0 0
  %834 = vmatpush1.bf16.msra.mxu0 %v279
  %835 = vmatprep.subr.bf16.mxu0 0
  %836 = vmatpush1.bf16.msra.mxu0 %v280
  %837 = vmatprep.subr.bf16.mxu0 0
  %838 = vmatpush1.bf16.msra.mxu0 %v281
  %839 = vmatprep.subr.bf16.mxu0 0
  %840 = vmatpush1.bf16.msra.mxu0 %v282
  %841 = vmatprep.subr.bf16.mxu0 0
  %842 = vmatpush1.bf16.msra.mxu0 %v283
  %843 = vmatprep.subr.bf16.mxu0 0
  %844 = vmatpush1.bf16.msra.mxu0 %v284
  %845 = vmatprep.subr.bf16.mxu0 0
  %846 = vmatpush1.bf16.msra.mxu0 %v285
  %847 = vmatprep.subr.bf16.mxu0 0
  %848 = vmatpush1.bf16.msra.mxu0 %v286
  %849 = vmatprep.subr.bf16.mxu0 0
  %850 = vmatpush1.bf16.msra.mxu0 %v287
  %851 = vmatprep.subr.bf16.mxu0 0
  %852 = vmatpush1.bf16.msra.mxu0 %v288
  %853 = vmatprep.subr.bf16.mxu0 0
  %854 = vmatpush1.bf16.msra.mxu0 %v289
  %855 = vmatprep.subr.bf16.mxu0 0
  %856 = vmatpush1.bf16.msra.mxu0 %v290
  %857 = vmatprep.subr.bf16.mxu0 0
  %858 = vmatpush1.bf16.msra.mxu0 %v291
  %859 = vmatprep.mubr.bf16.mxu0 %v552
  %860 = vmatmul.mubr.bf16.gmra.mrb[0].mxu0 %v551
  %v861 = vpop.f32.mrb[0].mxu0
  %v862 = vadd.f32 0.0, %v861
  %v863 = vpop.f32.mrb[0].mxu0
  %v864 = vpop.f32.mrb[0].mxu0
  %v865 = vpop.f32.mrb[0].mxu0
  %866 = vdwg.mxu0
  %s867 = scalar_lea.vmem %s6, 128
  %v868 = vld [vmem:[%s867] sm:$0xf]
  %v869 = vld [vmem:[%s867 + $0x4] sm:$0xf]
  %v870 = vld [vmem:[%s867 + $0x8] sm:$0xf]
  %v871 = vld [vmem:[%s867 + $0xc] sm:$0xf]
  %v872 = vld [vmem:[%s867 + $0x10] sm:$0xf]
  %v873 = vld [vmem:[%s867 + $0x14] sm:$0xf]
  %v874 = vld [vmem:[%s867 + $0x18] sm:$0xf]
  %v875 = vld [vmem:[%s867 + $0x1c] sm:$0xf]
  %v876 = vld [vmem:[%s867 + $0x20] sm:$0xf]
  %v877 = vld [vmem:[%s867 + $0x24] sm:$0xf]
  %v878 = vld [vmem:[%s867 + $0x28] sm:$0xf]
  %v879 = vld [vmem:[%s867 + $0x2c] sm:$0xf]
  %v880 = vld [vmem:[%s867 + $0x30] sm:$0xf]
  %v881 = vld [vmem:[%s867 + $0x34] sm:$0xf]
  %v882 = vld [vmem:[%s867 + $0x38] sm:$0xf]
  %v883 = vld [vmem:[%s867 + $0x3c] sm:$0xf]
  %v884 = vld [vmem:[%s867 + $0x40] sm:$0xf]
  %v885 = vld [vmem:[%s867 + $0x44] sm:$0xf]
  %v886 = vld [vmem:[%s867 + $0x48] sm:$0xf]
  %v887 = vld [vmem:[%s867 + $0x4c] sm:$0xf]
  %v888 = vld [vmem:[%s867 + $0x50] sm:$0xf]
  %v889 = vld [vmem:[%s867 + $0x54] sm:$0xf]
  %v890 = vld [vmem:[%s867 + $0x58] sm:$0xf]
  %v891 = vld [vmem:[%s867 + $0x5c] sm:$0xf]
  %v892 = vld [vmem:[%s867 + $0x60] sm:$0xf]
  %v893 = vld [vmem:[%s867 + $0x64] sm:$0xf]
  %v894 = vld [vmem:[%s867 + $0x68] sm:$0xf]
  %v895 = vld [vmem:[%s867 + $0x6c] sm:$0xf]
  %v896 = vld [vmem:[%s867 + $0x70] sm:$0xf]
  %v897 = vld [vmem:[%s867 + $0x74] sm:$0xf]
  %v898 = vld [vmem:[%s867 + $0x78] sm:$0xf]
  %v899 = vld [vmem:[%s867 + $0x7c] sm:$0xf]
  %v932 = vunpack.c.l.b16 %v868
  %v933 = vunpack.c.l.b16 %v869
  %v934 = vunpack.c.l.b16 %v870
  %v935 = vunpack.c.l.b16 %v871
  %v936 = vunpack.c.l.b16 %v872
  %v937 = vunpack.c.l.b16 %v873
  %v938 = vunpack.c.l.b16 %v874
  %v939 = vunpack.c.l.b16 %v875
  %v940 = vunpack.c.l.b16 %v876
  %v941 = vunpack.c.l.b16 %v877
  %v942 = vunpack.c.l.b16 %v878
  %v943 = vunpack.c.l.b16 %v879
  %v944 = vunpack.c.l.b16 %v880
  %v945 = vunpack.c.l.b16 %v881
  %v946 = vunpack.c.l.b16 %v882
  %v947 = vunpack.c.l.b16 %v883
  %v948 = vunpack.c.l.b16 %v884
  %v949 = vunpack.c.l.b16 %v885
  %v950 = vunpack.c.l.b16 %v886
  %v951 = vunpack.c.l.b16 %v887
  %v952 = vunpack.c.l.b16 %v888
  %v953 = vunpack.c.l.b16 %v889
  %v954 = vunpack.c.l.b16 %v890
  %v955 = vunpack.c.l.b16 %v891
  %v956 = vunpack.c.l.b16 %v892
  %v957 = vunpack.c.l.b16 %v893
  %v958 = vunpack.c.l.b16 %v894
  %v959 = vunpack.c.l.b16 %v895
  %v960 = vunpack.c.l.b16 %v896
  %v961 = vunpack.c.l.b16 %v897
  %v962 = vunpack.c.l.b16 %v898
  %v963 = vunpack.c.l.b16 %v899
  %v964 = vpack.c.b16 %v933, %v932
  %v965 = vpack.c.b16 %v935, %v934
  %v966 = vpack.c.b16 %v937, %v936
  %v967 = vpack.c.b16 %v939, %v938
  %v968 = vpack.c.b16 %v941, %v940
  %v969 = vpack.c.b16 %v943, %v942
  %v970 = vpack.c.b16 %v945, %v944
  %v971 = vpack.c.b16 %v947, %v946
  %v972 = vpack.c.b16 %v949, %v948
  %v973 = vpack.c.b16 %v951, %v950
  %v974 = vpack.c.b16 %v953, %v952
  %v975 = vpack.c.b16 %v955, %v954
  %v976 = vpack.c.b16 %v957, %v956
  %v977 = vpack.c.b16 %v959, %v958
  %v978 = vpack.c.b16 %v961, %v960
  %v979 = vpack.c.b16 %v963, %v962
  %996 = vmatprep.subr.bf16.mxu0 0
  %997 = vmatpush1.bf16.msra.mxu0 %v964
  %998 = vmatprep.subr.bf16.mxu0 0
  %999 = vmatpush1.bf16.msra.mxu0 %v965
  %1000 = vmatprep.subr.bf16.mxu0 0
  %1001 = vmatpush1.bf16.msra.mxu0 %v966
  %1002 = vmatprep.subr.bf16.mxu0 0
  %1003 = vmatpush1.bf16.msra.mxu0 %v967
  %1004 = vmatprep.subr.bf16.mxu0 0
  %1005 = vmatpush1.bf16.msra.mxu0 %v968
  %1006 = vmatprep.subr.bf16.mxu0 0
  %1007 = vmatpush1.bf16.msra.mxu0 %v969
  %1008 = vmatprep.subr.bf16.mxu0 0
  %1009 = vmatpush1.bf16.msra.mxu0 %v970
  %1010 = vmatprep.subr.bf16.mxu0 0
  %1011 = vmatpush1.bf16.msra.mxu0 %v971
  %1012 = vmatprep.subr.bf16.mxu0 0
  %1013 = vmatpush1.bf16.msra.mxu0 %v972
  %1014 = vmatprep.subr.bf16.mxu0 0
  %1015 = vmatpush1.bf16.msra.mxu0 %v973
  %1016 = vmatprep.subr.bf16.mxu0 0
  %1017 = vmatpush1.bf16.msra.mxu0 %v974
  %1018 = vmatprep.subr.bf16.mxu0 0
  %1019 = vmatpush1.bf16.msra.mxu0 %v975
  %1020 = vmatprep.subr.bf16.mxu0 0
  %1021 = vmatpush1.bf16.msra.mxu0 %v976
  %1022 = vmatprep.subr.bf16.mxu0 0
  %1023 = vmatpush1.bf16.msra.mxu0 %v977
  %1024 = vmatprep.subr.bf16.mxu0 0
  %1025 = vmatpush1.bf16.msra.mxu0 %v978
  %1026 = vmatprep.subr.bf16.mxu0 0
  %1027 = vmatpush1.bf16.msra.mxu0 %v979
  %1028 = vmatprep.mubr.bf16.mxu0 %v552
  %1029 = vmatmul.mubr.bf16.gmra.mrb[0].mxu0 %v551
  %v1030 = vpop.f32.mrb[0].mxu0
  %v1031 = vadd.f32 0.0, %v1030
  %v1032 = vpop.f32.mrb[0].mxu0
  %v1033 = vpop.f32.mrb[0].mxu0
  %v1034 = vpop.f32.mrb[0].mxu0
  %1035 = vdwg.mxu0
  %s1036 = scalar_lea.vmem %s3, 256
  %v1037 = vld [vmem:[%s1036] sm:$0xf]
  %v1038 = vld [vmem:[%s1036 + $0x4] sm:$0xf]
  %v1039 = vld [vmem:[%s1036 + $0x8] sm:$0xf]
  %v1040 = vld [vmem:[%s1036 + $0xc] sm:$0xf]
  %v1041 = vld [vmem:[%s1036 + $0x10] sm:$0xf]
  %v1042 = vld [vmem:[%s1036 + $0x14] sm:$0xf]
  %v1043 = vld [vmem:[%s1036 + $0x18] sm:$0xf]
  %v1044 = vld [vmem:[%s1036 + $0x1c] sm:$0xf]
  %v1045 = vld [vmem:[%s1036 + $0x20] sm:$0xf]
  %v1046 = vld [vmem:[%s1036 + $0x24] sm:$0xf]
  %v1047 = vld [vmem:[%s1036 + $0x28] sm:$0xf]
  %v1048 = vld [vmem:[%s1036 + $0x2c] sm:$0xf]
  %v1049 = vld [vmem:[%s1036 + $0x30] sm:$0xf]
  %v1050 = vld [vmem:[%s1036 + $0x34] sm:$0xf]
  %v1051 = vld [vmem:[%s1036 + $0x38] sm:$0xf]
  %v1052 = vld [vmem:[%s1036 + $0x3c] sm:$0xf]
  %v1053 = vld [vmem:[%s1036 + $0x40] sm:$0xf]
  %v1054 = vld [vmem:[%s1036 + $0x44] sm:$0xf]
  %v1055 = vld [vmem:[%s1036 + $0x48] sm:$0xf]
  %v1056 = vld [vmem:[%s1036 + $0x4c] sm:$0xf]
  %v1057 = vld [vmem:[%s1036 + $0x50] sm:$0xf]
  %v1058 = vld [vmem:[%s1036 + $0x54] sm:$0xf]
  %v1059 = vld [vmem:[%s1036 + $0x58] sm:$0xf]
  %v1060 = vld [vmem:[%s1036 + $0x5c] sm:$0xf]
  %v1061 = vld [vmem:[%s1036 + $0x60] sm:$0xf]
  %v1062 = vld [vmem:[%s1036 + $0x64] sm:$0xf]
  %v1063 = vld [vmem:[%s1036 + $0x68] sm:$0xf]
  %v1064 = vld [vmem:[%s1036 + $0x6c] sm:$0xf]
  %v1065 = vld [vmem:[%s1036 + $0x70] sm:$0xf]
  %v1066 = vld [vmem:[%s1036 + $0x74] sm:$0xf]
  %v1067 = vld [vmem:[%s1036 + $0x78] sm:$0xf]
  %v1068 = vld [vmem:[%s1036 + $0x7c] sm:$0xf]
  %v1101 = vunpack.c.l.b16 %v1037
  %v1102 = vunpack.c.l.b16 %v1038
  %v1103 = vunpack.c.l.b16 %v1039
  %v1104 = vunpack.c.l.b16 %v1040
  %v1105 = vunpack.c.l.b16 %v1041
  %v1106 = vunpack.c.l.b16 %v1042
  %v1107 = vunpack.c.l.b16 %v1043
  %v1108 = vunpack.c.l.b16 %v1044
  %v1109 = vunpack.c.l.b16 %v1045
  %v1110 = vunpack.c.l.b16 %v1046
  %v1111 = vunpack.c.l.b16 %v1047
  %v1112 = vunpack.c.l.b16 %v1048
  %v1113 = vunpack.c.l.b16 %v1049
  %v1114 = vunpack.c.l.b16 %v1050
  %v1115 = vunpack.c.l.b16 %v1051
  %v1116 = vunpack.c.l.b16 %v1052
  %v1117 = vunpack.c.l.b16 %v1053
  %v1118 = vunpack.c.l.b16 %v1054
  %v1119 = vunpack.c.l.b16 %v1055
  %v1120 = vunpack.c.l.b16 %v1056
  %v1121 = vunpack.c.l.b16 %v1057
  %v1122 = vunpack.c.l.b16 %v1058
  %v1123 = vunpack.c.l.b16 %v1059
  %v1124 = vunpack.c.l.b16 %v1060
  %v1125 = vunpack.c.l.b16 %v1061
  %v1126 = vunpack.c.l.b16 %v1062
  %v1127 = vunpack.c.l.b16 %v1063
  %v1128 = vunpack.c.l.b16 %v1064
  %v1129 = vunpack.c.l.b16 %v1065
  %v1130 = vunpack.c.l.b16 %v1066
  %v1131 = vunpack.c.l.b16 %v1067
  %v1132 = vunpack.c.l.b16 %v1068
  %v1133 = vpack.c.b16 %v1102, %v1101
  %v1134 = vpack.c.b16 %v1104, %v1103
  %v1135 = vpack.c.b16 %v1106, %v1105
  %v1136 = vpack.c.b16 %v1108, %v1107
  %v1137 = vpack.c.b16 %v1110, %v1109
  %v1138 = vpack.c.b16 %v1112, %v1111
  %v1139 = vpack.c.b16 %v1114, %v1113
  %v1140 = vpack.c.b16 %v1116, %v1115
  %v1141 = vpack.c.b16 %v1118, %v1117
  %v1142 = vpack.c.b16 %v1120, %v1119
  %v1143 = vpack.c.b16 %v1122, %v1121
  %v1144 = vpack.c.b16 %v1124, %v1123
  %v1145 = vpack.c.b16 %v1126, %v1125
  %v1146 = vpack.c.b16 %v1128, %v1127
  %v1147 = vpack.c.b16 %v1130, %v1129
  %v1148 = vpack.c.b16 %v1132, %v1131
  %1165 = vmatprep.subr.bf16.mxu0 0
  %1166 = vmatpush1.bf16.msra.mxu0 %v1133
  %1167 = vmatprep.subr.bf16.mxu0 0
  %1168 = vmatpush1.bf16.msra.mxu0 %v1134
  %1169 = vmatprep.subr.bf16.mxu0 0
  %1170 = vmatpush1.bf16.msra.mxu0 %v1135
  %1171 = vmatprep.subr.bf16.mxu0 0
  %1172 = vmatpush1.bf16.msra.mxu0 %v1136
  %1173 = vmatprep.subr.bf16.mxu0 0
  %1174 = vmatpush1.bf16.msra.mxu0 %v1137
  %1175 = vmatprep.subr.bf16.mxu0 0
  %1176 = vmatpush1.bf16.msra.mxu0 %v1138
  %1177 = vmatprep.subr.bf16.mxu0 0
  %1178 = vmatpush1.bf16.msra.mxu0 %v1139
  %1179 = vmatprep.subr.bf16.mxu0 0
  %1180 = vmatpush1.bf16.msra.mxu0 %v1140
  %1181 = vmatprep.subr.bf16.mxu0 0
  %1182 = vmatpush1.bf16.msra.mxu0 %v1141
  %1183 = vmatprep.subr.bf16.mxu0 0
  %1184 = vmatpush1.bf16.msra.mxu0 %v1142
  %1185 = vmatprep.subr.bf16.mxu0 0
  %1186 = vmatpush1.bf16.msra.mxu0 %v1143
  %1187 = vmatprep.subr.bf16.mxu0 0
  %1188 = vmatpush1.bf16.msra.mxu0 %v1144
  %1189 = vmatprep.subr.bf16.mxu0 0
  %1190 = vmatpush1.bf16.msra.mxu0 %v1145
  %1191 = vmatprep.subr.bf16.mxu0 0
  %1192 = vmatpush1.bf16.msra.mxu0 %v1146
  %1193 = vmatprep.subr.bf16.mxu0 0
  %1194 = vmatpush1.bf16.msra.mxu0 %v1147
  %1195 = vmatprep.subr.bf16.mxu0 0
  %1196 = vmatpush1.bf16.msra.mxu0 %v1148
  %1197 = vmatprep.mubr.bf16.mxu0 %v147
  %1198 = vmatmul.mubr.bf16.gmra.mrb[0].mxu0 %v146
  %v1199 = vpop.f32.mrb[0].mxu0
  %v1200 = vadd.f32 0.0, %v1199
  %v1201 = vpop.f32.mrb[0].mxu0
  %v1202 = vpop.f32.mrb[0].mxu0
  %v1203 = vpop.f32.mrb[0].mxu0
  %1204 = vdwg.mxu0
  %v1205 = vadd.f32 %v822, %v1200
  %1206 = vmatprep.subr.bf16.mxu0 0
  %1207 = vmatpush1.bf16.msra.mxu0 %v276
  %1208 = vmatprep.subr.bf16.mxu0 0
  %1209 = vmatpush1.bf16.msra.mxu0 %v277
  %1210 = vmatprep.subr.bf16.mxu0 0
  %1211 = vmatpush1.bf16.msra.mxu0 %v278
  %1212 = vmatprep.subr.bf16.mxu0 0
  %1213 = vmatpush1.bf16.msra.mxu0 %v279
  %1214 = vmatprep.subr.bf16.mxu0 0
  %1215 = vmatpush1.bf16.msra.mxu0 %v280
  %1216 = vmatprep.subr.bf16.mxu0 0
  %1217 = vmatpush1.bf16.msra.mxu0 %v281
  %1218 = vmatprep.subr.bf16.mxu0 0
  %1219 = vmatpush1.bf16.msra.mxu0 %v282
  %1220 = vmatprep.subr.bf16.mxu0 0
  %1221 = vmatpush1.bf16.msra.mxu0 %v283
  %1222 = vmatprep.subr.bf16.mxu0 0
  %1223 = vmatpush1.bf16.msra.mxu0 %v284
  %1224 = vmatprep.subr.bf16.mxu0 0
  %1225 = vmatpush1.bf16.msra.mxu0 %v285
  %1226 = vmatprep.subr.bf16.mxu0 0
  %1227 = vmatpush1.bf16.msra.mxu0 %v286
  %1228 = vmatprep.subr.bf16.mxu0 0
  %1229 = vmatpush1.bf16.msra.mxu0 %v287
  %1230 = vmatprep.subr.bf16.mxu0 0
  %1231 = vmatpush1.bf16.msra.mxu0 %v288
  %1232 = vmatprep.subr.bf16.mxu0 0
  %1233 = vmatpush1.bf16.msra.mxu0 %v289
  %1234 = vmatprep.subr.bf16.mxu0 0
  %1235 = vmatpush1.bf16.msra.mxu0 %v290
  %1236 = vmatprep.subr.bf16.mxu0 0
  %1237 = vmatpush1.bf16.msra.mxu0 %v291
  %1238 = vmatprep.mubr.bf16.mxu0 %v147
  %1239 = vmatmul.mubr.bf16.gmra.mrb[0].mxu0 %v146
  %v1240 = vpop.f32.mrb[0].mxu0
  %v1241 = vadd.f32 0.0, %v1240
  %v1242 = vpop.f32.mrb[0].mxu0
  %v1243 = vpop.f32.mrb[0].mxu0
  %v1244 = vpop.f32.mrb[0].mxu0
  %1245 = vdwg.mxu0
  %s1246 = scalar_lea.vmem %s6, 256
  %v1247 = vld [vmem:[%s1246] sm:$0xf]
  %v1248 = vld [vmem:[%s1246 + $0x4] sm:$0xf]
  %v1249 = vld [vmem:[%s1246 + $0x8] sm:$0xf]
  %v1250 = vld [vmem:[%s1246 + $0xc] sm:$0xf]
  %v1251 = vld [vmem:[%s1246 + $0x10] sm:$0xf]
  %v1252 = vld [vmem:[%s1246 + $0x14] sm:$0xf]
  %v1253 = vld [vmem:[%s1246 + $0x18] sm:$0xf]
  %v1254 = vld [vmem:[%s1246 + $0x1c] sm:$0xf]
  %v1255 = vld [vmem:[%s1246 + $0x20] sm:$0xf]
  %v1256 = vld [vmem:[%s1246 + $0x24] sm:$0xf]
  %v1257 = vld [vmem:[%s1246 + $0x28] sm:$0xf]
  %v1258 = vld [vmem:[%s1246 + $0x2c] sm:$0xf]
  %v1259 = vld [vmem:[%s1246 + $0x30] sm:$0xf]
  %v1260 = vld [vmem:[%s1246 + $0x34] sm:$0xf]
  %v1261 = vld [vmem:[%s1246 + $0x38] sm:$0xf]
  %v1262 = vld [vmem:[%s1246 + $0x3c] sm:$0xf]
  %v1263 = vld [vmem:[%s1246 + $0x40] sm:$0xf]
  %v1264 = vld [vmem:[%s1246 + $0x44] sm:$0xf]
  %v1265 = vld [vmem:[%s1246 + $0x48] sm:$0xf]
  %v1266 = vld [vmem:[%s1246 + $0x4c] sm:$0xf]
  %v1267 = vld [vmem:[%s1246 + $0x50] sm:$0xf]
  %v1268 = vld [vmem:[%s1246 + $0x54] sm:$0xf]
  %v1269 = vld [vmem:[%s1246 + $0x58] sm:$0xf]
  %v1270 = vld [vmem:[%s1246 + $0x5c] sm:$0xf]
  %v1271 = vld [vmem:[%s1246 + $0x60] sm:$0xf]
  %v1272 = vld [vmem:[%s1246 + $0x64] sm:$0xf]
  %v1273 = vld [vmem:[%s1246 + $0x68] sm:$0xf]
  %v1274 = vld [vmem:[%s1246 + $0x6c] sm:$0xf]
  %v1275 = vld [vmem:[%s1246 + $0x70] sm:$0xf]
  %v1276 = vld [vmem:[%s1246 + $0x74] sm:$0xf]
  %v1277 = vld [vmem:[%s1246 + $0x78] sm:$0xf]
  %v1278 = vld [vmem:[%s1246 + $0x7c] sm:$0xf]
  %v1311 = vunpack.c.l.b16 %v1247
  %v1312 = vunpack.c.l.b16 %v1248
  %v1313 = vunpack.c.l.b16 %v1249
  %v1314 = vunpack.c.l.b16 %v1250
  %v1315 = vunpack.c.l.b16 %v1251
  %v1316 = vunpack.c.l.b16 %v1252
  %v1317 = vunpack.c.l.b16 %v1253
  %v1318 = vunpack.c.l.b16 %v1254
  %v1319 = vunpack.c.l.b16 %v1255
  %v1320 = vunpack.c.l.b16 %v1256
  %v1321 = vunpack.c.l.b16 %v1257
  %v1322 = vunpack.c.l.b16 %v1258
  %v1323 = vunpack.c.l.b16 %v1259
  %v1324 = vunpack.c.l.b16 %v1260
  %v1325 = vunpack.c.l.b16 %v1261
  %v1326 = vunpack.c.l.b16 %v1262
  %v1327 = vunpack.c.l.b16 %v1263
  %v1328 = vunpack.c.l.b16 %v1264
  %v1329 = vunpack.c.l.b16 %v1265
  %v1330 = vunpack.c.l.b16 %v1266
  %v1331 = vunpack.c.l.b16 %v1267
  %v1332 = vunpack.c.l.b16 %v1268
  %v1333 = vunpack.c.l.b16 %v1269
  %v1334 = vunpack.c.l.b16 %v1270
  %v1335 = vunpack.c.l.b16 %v1271
  %v1336 = vunpack.c.l.b16 %v1272
  %v1337 = vunpack.c.l.b16 %v1273
  %v1338 = vunpack.c.l.b16 %v1274
  %v1339 = vunpack.c.l.b16 %v1275
  %v1340 = vunpack.c.l.b16 %v1276
  %v1341 = vunpack.c.l.b16 %v1277
  %v1342 = vunpack.c.l.b16 %v1278
  %v1343 = vpack.c.b16 %v1312, %v1311
  %v1344 = vpack.c.b16 %v1314, %v1313
  %v1345 = vpack.c.b16 %v1316, %v1315
  %v1346 = vpack.c.b16 %v1318, %v1317
  %v1347 = vpack.c.b16 %v1320, %v1319
  %v1348 = vpack.c.b16 %v1322, %v1321
  %v1349 = vpack.c.b16 %v1324, %v1323
  %v1350 = vpack.c.b16 %v1326, %v1325
  %v1351 = vpack.c.b16 %v1328, %v1327
  %v1352 = vpack.c.b16 %v1330, %v1329
  %v1353 = vpack.c.b16 %v1332, %v1331
  %v1354 = vpack.c.b16 %v1334, %v1333
  %v1355 = vpack.c.b16 %v1336, %v1335
  %v1356 = vpack.c.b16 %v1338, %v1337
  %v1357 = vpack.c.b16 %v1340, %v1339
  %v1358 = vpack.c.b16 %v1342, %v1341
  %1375 = vmatprep.subr.bf16.mxu0 0
  %1376 = vmatpush1.bf16.msra.mxu0 %v1343
  %1377 = vmatprep.subr.bf16.mxu0 0
  %1378 = vmatpush1.bf16.msra.mxu0 %v1344
  %1379 = vmatprep.subr.bf16.mxu0 0
  %1380 = vmatpush1.bf16.msra.mxu0 %v1345
  %1381 = vmatprep.subr.bf16.mxu0 0
  %1382 = vmatpush1.bf16.msra.mxu0 %v1346
  %1383 = vmatprep.subr.bf16.mxu0 0
  %1384 = vmatpush1.bf16.msra.mxu0 %v1347
  %1385 = vmatprep.subr.bf16.mxu0 0
  %1386 = vmatpush1.bf16.msra.mxu0 %v1348
  %1387 = vmatprep.subr.bf16.mxu0 0
  %1388 = vmatpush1.bf16.msra.mxu0 %v1349
  %1389 = vmatprep.subr.bf16.mxu0 0
  %1390 = vmatpush1.bf16.msra.mxu0 %v1350
  %1391 = vmatprep.subr.bf16.mxu0 0
  %1392 = vmatpush1.bf16.msra.mxu0 %v1351
  %1393 = vmatprep.subr.bf16.mxu0 0
  %1394 = vmatpush1.bf16.msra.mxu0 %v1352
  %1395 = vmatprep.subr.bf16.mxu0 0
  %1396 = vmatpush1.bf16.msra.mxu0 %v1353
  %1397 = vmatprep.subr.bf16.mxu0 0
  %1398 = vmatpush1.bf16.msra.mxu0 %v1354
  %1399 = vmatprep.subr.bf16.mxu0 0
  %1400 = vmatpush1.bf16.msra.mxu0 %v1355
  %1401 = vmatprep.subr.bf16.mxu0 0
  %1402 = vmatpush1.bf16.msra.mxu0 %v1356
  %1403 = vmatprep.subr.bf16.mxu0 0
  %1404 = vmatpush1.bf16.msra.mxu0 %v1357
  %1405 = vmatprep.subr.bf16.mxu0 0
  %1406 = vmatpush1.bf16.msra.mxu0 %v1358
  %1407 = vmatprep.mubr.bf16.mxu0 %v147
  %1408 = vmatmul.mubr.bf16.gmra.mrb[0].mxu0 %v146
  %v1409 = vpop.f32.mrb[0].mxu0
  %v1410 = vadd.f32 0.0, %v1409
  %v1411 = vpop.f32.mrb[0].mxu0
  %v1412 = vpop.f32.mrb[0].mxu0
  %v1413 = vpop.f32.mrb[0].mxu0
  %1414 = vdwg.mxu0
  %s1415 = scalar_lea.vmem %s3, 384
  %v1416 = vld [vmem:[%s1415] sm:$0xf]
  %v1417 = vld [vmem:[%s1415 + $0x4] sm:$0xf]
  %v1418 = vld [vmem:[%s1415 + $0x8] sm:$0xf]
  %v1419 = vld [vmem:[%s1415 + $0xc] sm:$0xf]
  %v1420 = vld [vmem:[%s1415 + $0x10] sm:$0xf]
  %v1421 = vld [vmem:[%s1415 + $0x14] sm:$0xf]
  %v1422 = vld [vmem:[%s1415 + $0x18] sm:$0xf]
  %v1423 = vld [vmem:[%s1415 + $0x1c] sm:$0xf]
  %v1424 = vld [vmem:[%s1415 + $0x20] sm:$0xf]
  %v1425 = vld [vmem:[%s1415 + $0x24] sm:$0xf]
  %v1426 = vld [vmem:[%s1415 + $0x28] sm:$0xf]
  %v1427 = vld [vmem:[%s1415 + $0x2c] sm:$0xf]
  %v1428 = vld [vmem:[%s1415 + $0x30] sm:$0xf]
  %v1429 = vld [vmem:[%s1415 + $0x34] sm:$0xf]
  %v1430 = vld [vmem:[%s1415 + $0x38] sm:$0xf]
  %v1431 = vld [vmem:[%s1415 + $0x3c] sm:$0xf]
  %v1432 = vld [vmem:[%s1415 + $0x40] sm:$0xf]
  %v1433 = vld [vmem:[%s1415 + $0x44] sm:$0xf]
  %v1434 = vld [vmem:[%s1415 + $0x48] sm:$0xf]
  %v1435 = vld [vmem:[%s1415 + $0x4c] sm:$0xf]
  %v1436 = vld [vmem:[%s1415 + $0x50] sm:$0xf]
  %v1437 = vld [vmem:[%s1415 + $0x54] sm:$0xf]
  %v1438 = vld [vmem:[%s1415 + $0x58] sm:$0xf]
  %v1439 = vld [vmem:[%s1415 + $0x5c] sm:$0xf]
  %v1440 = vld [vmem:[%s1415 + $0x60] sm:$0xf]
  %v1441 = vld [vmem:[%s1415 + $0x64] sm:$0xf]
  %v1442 = vld [vmem:[%s1415 + $0x68] sm:$0xf]
  %v1443 = vld [vmem:[%s1415 + $0x6c] sm:$0xf]
  %v1444 = vld [vmem:[%s1415 + $0x70] sm:$0xf]
  %v1445 = vld [vmem:[%s1415 + $0x74] sm:$0xf]
  %v1446 = vld [vmem:[%s1415 + $0x78] sm:$0xf]
  %v1447 = vld [vmem:[%s1415 + $0x7c] sm:$0xf]
  %v1450 = vrot.slane %v146, 4
  %v1451 = vrot.slane %v147, 4
  %v1486 = vunpack.c.l.b16 %v1416
  %v1487 = vunpack.c.l.b16 %v1417
  %v1488 = vunpack.c.l.b16 %v1418
  %v1489 = vunpack.c.l.b16 %v1419
  %v1490 = vunpack.c.l.b16 %v1420
  %v1491 = vunpack.c.l.b16 %v1421
  %v1492 = vunpack.c.l.b16 %v1422
  %v1493 = vunpack.c.l.b16 %v1423
  %v1494 = vunpack.c.l.b16 %v1424
  %v1495 = vunpack.c.l.b16 %v1425
  %v1496 = vunpack.c.l.b16 %v1426
  %v1497 = vunpack.c.l.b16 %v1427
  %v1498 = vunpack.c.l.b16 %v1428
  %v1499 = vunpack.c.l.b16 %v1429
  %v1500 = vunpack.c.l.b16 %v1430
  %v1501 = vunpack.c.l.b16 %v1431
  %v1502 = vunpack.c.l.b16 %v1432
  %v1503 = vunpack.c.l.b16 %v1433
  %v1504 = vunpack.c.l.b16 %v1434
  %v1505 = vunpack.c.l.b16 %v1435
  %v1506 = vunpack.c.l.b16 %v1436
  %v1507 = vunpack.c.l.b16 %v1437
  %v1508 = vunpack.c.l.b16 %v1438
  %v1509 = vunpack.c.l.b16 %v1439
  %v1510 = vunpack.c.l.b16 %v1440
  %v1511 = vunpack.c.l.b16 %v1441
  %v1512 = vunpack.c.l.b16 %v1442
  %v1513 = vunpack.c.l.b16 %v1443
  %v1514 = vunpack.c.l.b16 %v1444
  %v1515 = vunpack.c.l.b16 %v1445
  %v1516 = vunpack.c.l.b16 %v1446
  %v1517 = vunpack.c.l.b16 %v1447
  %v1518 = vpack.c.b16 %v1487, %v1486
  %v1519 = vpack.c.b16 %v1489, %v1488
  %v1520 = vpack.c.b16 %v1491, %v1490
  %v1521 = vpack.c.b16 %v1493, %v1492
  %v1522 = vpack.c.b16 %v1495, %v1494
  %v1523 = vpack.c.b16 %v1497, %v1496
  %v1524 = vpack.c.b16 %v1499, %v1498
  %v1525 = vpack.c.b16 %v1501, %v1500
  %v1526 = vpack.c.b16 %v1503, %v1502
  %v1527 = vpack.c.b16 %v1505, %v1504
  %v1528 = vpack.c.b16 %v1507, %v1506
  %v1529 = vpack.c.b16 %v1509, %v1508
  %v1530 = vpack.c.b16 %v1511, %v1510
  %v1531 = vpack.c.b16 %v1513, %v1512
  %v1532 = vpack.c.b16 %v1515, %v1514
  %v1533 = vpack.c.b16 %v1517, %v1516
  %1550 = vmatprep.subr.bf16.mxu0 0
  %1551 = vmatpush1.bf16.msra.mxu0 %v1518
  %1552 = vmatprep.subr.bf16.mxu0 0
  %1553 = vmatpush1.bf16.msra.mxu0 %v1519
  %1554 = vmatprep.subr.bf16.mxu0 0
  %1555 = vmatpush1.bf16.msra.mxu0 %v1520
  %1556 = vmatprep.subr.bf16.mxu0 0
  %1557 = vmatpush1.bf16.msra.mxu0 %v1521
  %1558 = vmatprep.subr.bf16.mxu0 0
  %1559 = vmatpush1.bf16.msra.mxu0 %v1522
  %1560 = vmatprep.subr.bf16.mxu0 0
  %1561 = vmatpush1.bf16.msra.mxu0 %v1523
  %1562 = vmatprep.subr.bf16.mxu0 0
  %1563 = vmatpush1.bf16.msra.mxu0 %v1524
  %1564 = vmatprep.subr.bf16.mxu0 0
  %1565 = vmatpush1.bf16.msra.mxu0 %v1525
  %1566 = vmatprep.subr.bf16.mxu0 0
  %1567 = vmatpush1.bf16.msra.mxu0 %v1526
  %1568 = vmatprep.subr.bf16.mxu0 0
  %1569 = vmatpush1.bf16.msra.mxu0 %v1527
  %1570 = vmatprep.subr.bf16.mxu0 0
  %1571 = vmatpush1.bf16.msra.mxu0 %v1528
  %1572 = vmatprep.subr.bf16.mxu0 0
  %1573 = vmatpush1.bf16.msra.mxu0 %v1529
  %1574 = vmatprep.subr.bf16.mxu0 0
  %1575 = vmatpush1.bf16.msra.mxu0 %v1530
  %1576 = vmatprep.subr.bf16.mxu0 0
  %1577 = vmatpush1.bf16.msra.mxu0 %v1531
  %1578 = vmatprep.subr.bf16.mxu0 0
  %1579 = vmatpush1.bf16.msra.mxu0 %v1532
  %1580 = vmatprep.subr.bf16.mxu0 0
  %1581 = vmatpush1.bf16.msra.mxu0 %v1533
  %1582 = vmatprep.mubr.bf16.mxu0 %v1451
  %1583 = vmatmul.mubr.bf16.gmra.mrb[0].mxu0 %v1450
  %v1584 = vpop.f32.mrb[0].mxu0
  %v1585 = vadd.f32 0.0, %v1584
  %v1586 = vpop.f32.mrb[0].mxu0
  %v1587 = vpop.f32.mrb[0].mxu0
  %v1588 = vpop.f32.mrb[0].mxu0
  %1589 = vdwg.mxu0
  %v1590 = vadd.f32 %v1205, %v1585
  %1591 = vmatprep.subr.bf16.mxu0 0
  %1592 = vmatpush1.bf16.msra.mxu0 %v276
  %1593 = vmatprep.subr.bf16.mxu0 0
  %1594 = vmatpush1.bf16.msra.mxu0 %v277
  %1595 = vmatprep.subr.bf16.mxu0 0
  %1596 = vmatpush1.bf16.msra.mxu0 %v278
  %1597 = vmatprep.subr.bf16.mxu0 0
  %1598 = vmatpush1.bf16.msra.mxu0 %v279
  %1599 = vmatprep.subr.bf16.mxu0 0
  %1600 = vmatpush1.bf16.msra.mxu0 %v280
  %1601 = vmatprep.subr.bf16.mxu0 0
  %1602 = vmatpush1.bf16.msra.mxu0 %v281
  %1603 = vmatprep.subr.bf16.mxu0 0
  %1604 = vmatpush1.bf16.msra.mxu0 %v282
  %1605 = vmatprep.subr.bf16.mxu0 0
  %1606 = vmatpush1.bf16.msra.mxu0 %v283
  %1607 = vmatprep.subr.bf16.mxu0 0
  %1608 = vmatpush1.bf16.msra.mxu0 %v284
  %1609 = vmatprep.subr.bf16.mxu0 0
  %1610 = vmatpush1.bf16.msra.mxu0 %v285
  %1611 = vmatprep.subr.bf16.mxu0 0
  %1612 = vmatpush1.bf16.msra.mxu0 %v286
  %1613 = vmatprep.subr.bf16.mxu0 0
  %1614 = vmatpush1.bf16.msra.mxu0 %v287
  %1615 = vmatprep.subr.bf16.mxu0 0
  %1616 = vmatpush1.bf16.msra.mxu0 %v288
  %1617 = vmatprep.subr.bf16.mxu0 0
  %1618 = vmatpush1.bf16.msra.mxu0 %v289
  %1619 = vmatprep.subr.bf16.mxu0 0
  %1620 = vmatpush1.bf16.msra.mxu0 %v290
  %1621 = vmatprep.subr.bf16.mxu0 0
  %1622 = vmatpush1.bf16.msra.mxu0 %v291
  %1623 = vmatprep.mubr.bf16.mxu0 %v1451
  %1624 = vmatmul.mubr.bf16.gmra.mrb[0].mxu0 %v1450
  %v1625 = vpop.f32.mrb[0].mxu0
  %v1626 = vadd.f32 0.0, %v1625
  %v1627 = vpop.f32.mrb[0].mxu0
  %v1628 = vpop.f32.mrb[0].mxu0
  %v1629 = vpop.f32.mrb[0].mxu0
  %1630 = vdwg.mxu0
  %s1631 = scalar_lea.vmem %s6, 384
  %v1632 = vld [vmem:[%s1631] sm:$0xf]
  %v1633 = vld [vmem:[%s1631 + $0x4] sm:$0xf]
  %v1634 = vld [vmem:[%s1631 + $0x8] sm:$0xf]
  %v1635 = vld [vmem:[%s1631 + $0xc] sm:$0xf]
  %v1636 = vld [vmem:[%s1631 + $0x10] sm:$0xf]
  %v1637 = vld [vmem:[%s1631 + $0x14] sm:$0xf]
  %v1638 = vld [vmem:[%s1631 + $0x18] sm:$0xf]
  %v1639 = vld [vmem:[%s1631 + $0x1c] sm:$0xf]
  %v1640 = vld [vmem:[%s1631 + $0x20] sm:$0xf]
  %v1641 = vld [vmem:[%s1631 + $0x24] sm:$0xf]
  %v1642 = vld [vmem:[%s1631 + $0x28] sm:$0xf]
  %v1643 = vld [vmem:[%s1631 + $0x2c] sm:$0xf]
  %v1644 = vld [vmem:[%s1631 + $0x30] sm:$0xf]
  %v1645 = vld [vmem:[%s1631 + $0x34] sm:$0xf]
  %v1646 = vld [vmem:[%s1631 + $0x38] sm:$0xf]
  %v1647 = vld [vmem:[%s1631 + $0x3c] sm:$0xf]
  %v1648 = vld [vmem:[%s1631 + $0x40] sm:$0xf]
  %v1649 = vld [vmem:[%s1631 + $0x44] sm:$0xf]
  %v1650 = vld [vmem:[%s1631 + $0x48] sm:$0xf]
  %v1651 = vld [vmem:[%s1631 + $0x4c] sm:$0xf]
  %v1652 = vld [vmem:[%s1631 + $0x50] sm:$0xf]
  %v1653 = vld [vmem:[%s1631 + $0x54] sm:$0xf]
  %v1654 = vld [vmem:[%s1631 + $0x58] sm:$0xf]
  %v1655 = vld [vmem:[%s1631 + $0x5c] sm:$0xf]
  %v1656 = vld [vmem:[%s1631 + $0x60] sm:$0xf]
  %v1657 = vld [vmem:[%s1631 + $0x64] sm:$0xf]
  %v1658 = vld [vmem:[%s1631 + $0x68] sm:$0xf]
  %v1659 = vld [vmem:[%s1631 + $0x6c] sm:$0xf]
  %v1660 = vld [vmem:[%s1631 + $0x70] sm:$0xf]
  %v1661 = vld [vmem:[%s1631 + $0x74] sm:$0xf]
  %v1662 = vld [vmem:[%s1631 + $0x78] sm:$0xf]
  %v1663 = vld [vmem:[%s1631 + $0x7c] sm:$0xf]
  %v1696 = vunpack.c.l.b16 %v1632
  %v1697 = vunpack.c.l.b16 %v1633
  %v1698 = vunpack.c.l.b16 %v1634
  %v1699 = vunpack.c.l.b16 %v1635
  %v1700 = vunpack.c.l.b16 %v1636
  %v1701 = vunpack.c.l.b16 %v1637
  %v1702 = vunpack.c.l.b16 %v1638
  %v1703 = vunpack.c.l.b16 %v1639
  %v1704 = vunpack.c.l.b16 %v1640
  %v1705 = vunpack.c.l.b16 %v1641
  %v1706 = vunpack.c.l.b16 %v1642
  %v1707 = vunpack.c.l.b16 %v1643
  %v1708 = vunpack.c.l.b16 %v1644
  %v1709 = vunpack.c.l.b16 %v1645
  %v1710 = vunpack.c.l.b16 %v1646
  %v1711 = vunpack.c.l.b16 %v1647
  %v1712 = vunpack.c.l.b16 %v1648
  %v1713 = vunpack.c.l.b16 %v1649
  %v1714 = vunpack.c.l.b16 %v1650
  %v1715 = vunpack.c.l.b16 %v1651
  %v1716 = vunpack.c.l.b16 %v1652
  %v1717 = vunpack.c.l.b16 %v1653
  %v1718 = vunpack.c.l.b16 %v1654
  %v1719 = vunpack.c.l.b16 %v1655
  %v1720 = vunpack.c.l.b16 %v1656
  %v1721 = vunpack.c.l.b16 %v1657
  %v1722 = vunpack.c.l.b16 %v1658
  %v1723 = vunpack.c.l.b16 %v1659
  %v1724 = vunpack.c.l.b16 %v1660
  %v1725 = vunpack.c.l.b16 %v1661
  %v1726 = vunpack.c.l.b16 %v1662
  %v1727 = vunpack.c.l.b16 %v1663
  %v1728 = vpack.c.b16 %v1697, %v1696
  %v1729 = vpack.c.b16 %v1699, %v1698
  %v1730 = vpack.c.b16 %v1701, %v1700
  %v1731 = vpack.c.b16 %v1703, %v1702
  %v1732 = vpack.c.b16 %v1705, %v1704
  %v1733 = vpack.c.b16 %v1707, %v1706
  %v1734 = vpack.c.b16 %v1709, %v1708
  %v1735 = vpack.c.b16 %v1711, %v1710
  %v1736 = vpack.c.b16 %v1713, %v1712
  %v1737 = vpack.c.b16 %v1715, %v1714
  %v1738 = vpack.c.b16 %v1717, %v1716
  %v1739 = vpack.c.b16 %v1719, %v1718
  %v1740 = vpack.c.b16 %v1721, %v1720
  %v1741 = vpack.c.b16 %v1723, %v1722
  %v1742 = vpack.c.b16 %v1725, %v1724
  %v1743 = vpack.c.b16 %v1727, %v1726
  %1760 = vmatprep.subr.bf16.mxu0 0
  %1761 = vmatpush1.bf16.msra.mxu0 %v1728
  %1762 = vmatprep.subr.bf16.mxu0 0
  %1763 = vmatpush1.bf16.msra.mxu0 %v1729
  %1764 = vmatprep.subr.bf16.mxu0 0
  %1765 = vmatpush1.bf16.msra.mxu0 %v1730
  %1766 = vmatprep.subr.bf16.mxu0 0
  %1767 = vmatpush1.bf16.msra.mxu0 %v1731
  %1768 = vmatprep.subr.bf16.mxu0 0
  %1769 = vmatpush1.bf16.msra.mxu0 %v1732
  %1770 = vmatprep.subr.bf16.mxu0 0
  %1771 = vmatpush1.bf16.msra.mxu0 %v1733
  %1772 = vmatprep.subr.bf16.mxu0 0
  %1773 = vmatpush1.bf16.msra.mxu0 %v1734
  %1774 = vmatprep.subr.bf16.mxu0 0
  %1775 = vmatpush1.bf16.msra.mxu0 %v1735
  %1776 = vmatprep.subr.bf16.mxu0 0
  %1777 = vmatpush1.bf16.msra.mxu0 %v1736
  %1778 = vmatprep.subr.bf16.mxu0 0
  %1779 = vmatpush1.bf16.msra.mxu0 %v1737
  %1780 = vmatprep.subr.bf16.mxu0 0
  %1781 = vmatpush1.bf16.msra.mxu0 %v1738
  %1782 = vmatprep.subr.bf16.mxu0 0
  %1783 = vmatpush1.bf16.msra.mxu0 %v1739
  %1784 = vmatprep.subr.bf16.mxu0 0
  %1785 = vmatpush1.bf16.msra.mxu0 %v1740
  %1786 = vmatprep.subr.bf16.mxu0 0
  %1787 = vmatpush1.bf16.msra.mxu0 %v1741
  %1788 = vmatprep.subr.bf16.mxu0 0
  %1789 = vmatpush1.bf16.msra.mxu0 %v1742
  %1790 = vmatprep.subr.bf16.mxu0 0
  %1791 = vmatpush1.bf16.msra.mxu0 %v1743
  %1792 = vmatprep.mubr.bf16.mxu0 %v1451
  %1793 = vmatmul.mubr.bf16.gmra.mrb[0].mxu0 %v1450
  %v1794 = vpop.f32.mrb[0].mxu0
  %v1795 = vadd.f32 0.0, %v1794
  %v1796 = vpop.f32.mrb[0].mxu0
  %v1797 = vpop.f32.mrb[0].mxu0
  %v1798 = vpop.f32.mrb[0].mxu0
  %1799 = vdwg.mxu0
  %1801 = vrot.lane.b32.xlu0 %v862, 16
  %v1802 = vpop.permute.xlu0 %1801
  %1805 = vrot.lane.b32.xlu0 %v1241, 32
  %v1806 = vpop.permute.xlu0 %1805
  %1809 = vrot.lane.b32.xlu0 %v1626, 48
  %v1810 = vpop.permute.xlu0 %1809
  %v1812 = vsel %vm84, %v343, %v1802
  %vm1813 = vcmask 261120
  %v1814 = vsel %vm1813, %v1812, %v1806
  %vm1815 = vcmask 392192
  %v1816 = vsel %vm1815, %v1814, %v1810
  %1818 = vrot.lane.b32.xlu0 %v1031, 16
  %v1819 = vpop.permute.xlu0 %1818
  %1822 = vrot.lane.b32.xlu0 %v1410, 32
  %v1823 = vpop.permute.xlu0 %1822
  %1826 = vrot.lane.b32.xlu0 %v1795, 48
  %v1827 = vpop.permute.xlu0 %1826
  %v1829 = vsel %vm84, %v511, %v1819
  %v1830 = vsel %vm1813, %v1829, %v1823
  %v1831 = vsel %vm1815, %v1830, %v1827
  %v1832 = vld [vmem:[%s7] sm:$0x1]
  %v1834 = vlaneseq
  %v1835 = vshrl.u32 %v1834, 7
  %v1836 = vsub.s32 0, %v1835
  %v1837 = vrot.slane %v1832, %v1836
  %v1839 = vadd.f32 %v1831, %v1837
  %v1840 = vmul.f32 %v1839, 0.5
  %v1841 = vmul.f32 %v1839, 0.70710677
  %vm1842 = vcmp.ge.f32.partialorder %v1841, 0.0
  %v1843 = vsub.f32 0.0, %v1841
  %v1844 = vsel %vm1842, %v1841, %v1843
  %v1845 = vmul.f32 %v1844, 0.3275911
  %v1846 = vadd.f32 %v1845, 1.0
  %v1847 = vrcp.pop %v1846
  %v1848 = vmul.f32 1.0, %v1847
  %v1849 = vmul.f32 %v1848, 1.0614054
  %v1850 = vadd.f32 %v1849, -1.4531521
  %v1851 = vmul.f32 %v1848, %v1850
  %v1852 = vadd.f32 %v1851, 1.4214138
  %v1853 = vmul.f32 %v1848, %v1852
  %v1854 = vadd.f32 %v1853, -0.28449672
  %v1855 = vmul.f32 %v1848, %v1854
  %v1856 = vadd.f32 %v1855, 0.2548296
  %v1857 = vmul.f32 %v1848, %v1856
  %v1858 = vsub.f32 0.0, %v1844
  %v1859 = vmul.f32 %v1858, %v1844
  %v1860 = vmul.f32 %v1859, 1.442695
  %v1861 = vpow.pop %v1860
  %v1862 = vmul.f32 %v1857, %v1861
  %v1863 = vsub.f32 1.0, %v1862
  %v1864 = vsub.f32 0.0, %v1863
  %v1865 = vsel %vm1842, %v1863, %v1864
  %v1866 = vadd.f32 %v1865, 1.0
  %v1867 = vmul.f32 %v1840, %v1866
  %v1868 = vld [vmem:[%s8] sm:$0x1]
  %v1870 = vlaneseq
  %v1871 = vshrl.u32 %v1870, 7
  %v1872 = vsub.s32 0, %v1871
  %v1873 = vrot.slane %v1868, %v1872
  %v1875 = vmul.f32 %v1867, %v1873
  %v1876 = vld [vmem:[%s9] sm:$0x1]
  %v1878 = vlaneseq
  %v1879 = vshrl.u32 %v1878, 7
  %v1880 = vsub.s32 0, %v1879
  %v1881 = vrot.slane %v1876, %v1880
  %v1883 = vadd.f32 %v1875, %v1881
  %v1884 = vadd.f32 %v1883, %v1816
  %v1885 = vpack.c.bf16 %v1884, %v1884
  %v1886 = vld [vmem:[%s10] sm:$0xf]
  %v1887 = vld [vmem:[%s10 + $0x4] sm:$0xf]
  %v1888 = vld [vmem:[%s10 + $0x8] sm:$0xf]
  %v1889 = vld [vmem:[%s10 + $0xc] sm:$0xf]
  %v1890 = vld [vmem:[%s10 + $0x10] sm:$0xf]
  %v1891 = vld [vmem:[%s10 + $0x14] sm:$0xf]
  %v1892 = vld [vmem:[%s10 + $0x18] sm:$0xf]
  %v1893 = vld [vmem:[%s10 + $0x1c] sm:$0xf]
  %v1894 = vld [vmem:[%s11] sm:$0x1]
  %v1896 = vlaneseq
  %v1897 = vshrl.u32 %v1896, 7
  %v1898 = vsub.s32 0, %v1897
  %v1899 = vrot.slane %v1894, %v1898
  %v1909 = vunpack.c.l.b16 %v1886
  %v1910 = vunpack.c.l.b16 %v1887
  %v1911 = vunpack.c.l.b16 %v1888
  %v1912 = vunpack.c.l.b16 %v1889
  %v1913 = vunpack.c.l.b16 %v1890
  %v1914 = vunpack.c.l.b16 %v1891
  %v1915 = vunpack.c.l.b16 %v1892
  %v1916 = vunpack.c.l.b16 %v1893
  %v1917 = vpack.c.b16 %v1910, %v1909
  %v1918 = vpack.c.b16 %v1912, %v1911
  %v1919 = vpack.c.b16 %v1914, %v1913
  %v1920 = vpack.c.b16 %v1916, %v1915
  %vm1925 = vcmask 523264
  %v1927 = vsel %vm1925, %v1885, 0
  %1929 = vmatprep.subr.bf16.mxu0 0
  %1930 = vmatpush1.bf16.msra.mxu0 %v1917
  %1931 = vmatprep.subr.bf16.mxu0 0
  %1932 = vmatpush1.bf16.msra.mxu0 %v1918
  %1933 = vmatprep.subr.bf16.mxu0 0
  %1934 = vmatpush1.bf16.msra.mxu0 %v1919
  %1935 = vmatprep.subr.bf16.mxu0 0
  %1936 = vmatpush1.bf16.msra.mxu0 %v1920
  %1937 = vmatprep.subr.bf16.mxu0 0
  %1938 = vmatpush1.bf16.msra.mxu0 0
  %1939 = vmatprep.subr.bf16.mxu0 0
  %1940 = vmatpush1.bf16.msra.mxu0 0
  %1941 = vmatprep.subr.bf16.mxu0 0
  %1942 = vmatpush1.bf16.msra.mxu0 0
  %1943 = vmatprep.subr.bf16.mxu0 0
  %1944 = vmatpush1.bf16.msra.mxu0 0
  %1945 = vmatprep.subr.bf16.mxu0 0
  %1946 = vmatpush1.bf16.msra.mxu0 0
  %1947 = vmatprep.subr.bf16.mxu0 0
  %1948 = vmatpush1.bf16.msra.mxu0 0
  %1949 = vmatprep.subr.bf16.mxu0 0
  %1950 = vmatpush1.bf16.msra.mxu0 0
  %1951 = vmatprep.subr.bf16.mxu0 0
  %1952 = vmatpush1.bf16.msra.mxu0 0
  %1953 = vmatprep.subr.bf16.mxu0 0
  %1954 = vmatpush1.bf16.msra.mxu0 0
  %1955 = vmatprep.subr.bf16.mxu0 0
  %1956 = vmatpush1.bf16.msra.mxu0 0
  %1957 = vmatprep.subr.bf16.mxu0 0
  %1958 = vmatpush1.bf16.msra.mxu0 0
  %1959 = vmatprep.subr.bf16.mxu0 0
  %1960 = vmatpush1.bf16.msra.mxu0 0
  %1961 = vmatprep.mubr.bf16.mxu0 0
  %1962 = vmatmul.mubr.bf16.gmra.mrb[0].mxu0 %v1927
  %v1963 = vpop.f32.mrb[0].mxu0
  %v1964 = vadd.f32 %v1899, %v1963
  %v1965 = vpop.f32.mrb[0].mxu0
  %v1966 = vpop.f32.mrb[0].mxu0
  %v1967 = vpop.f32.mrb[0].mxu0
  %1968 = vdwg.mxu0
  %v1969 = vmul.f32 %v1964, 0.5
  %v1970 = vmul.f32 %v1964, 0.70710677
  %vm1971 = vcmp.ge.f32.partialorder %v1970, 0.0
  %v1972 = vsub.f32 0.0, %v1970
  %v1973 = vsel %vm1971, %v1970, %v1972
  %v1974 = vmul.f32 %v1973, 0.3275911
  %v1975 = vadd.f32 %v1974, 1.0
  %v1976 = vrcp.pop %v1975
  %v1977 = vmul.f32 1.0, %v1976
  %v1978 = vmul.f32 %v1977, 1.0614054
  %v1979 = vadd.f32 %v1978, -1.4531521
  %v1980 = vmul.f32 %v1977, %v1979
  %v1981 = vadd.f32 %v1980, 1.4214138
  %v1982 = vmul.f32 %v1977, %v1981
  %v1983 = vadd.f32 %v1982, -0.28449672
  %v1984 = vmul.f32 %v1977, %v1983
  %v1985 = vadd.f32 %v1984, 0.2548296
  %v1986 = vmul.f32 %v1977, %v1985
  %v1987 = vsub.f32 0.0, %v1973
  %v1988 = vmul.f32 %v1987, %v1973
  %v1989 = vmul.f32 %v1988, 1.442695
  %v1990 = vpow.pop %v1989
  %v1991 = vmul.f32 %v1986, %v1990
  %v1992 = vsub.f32 1.0, %v1991
  %v1993 = vsub.f32 0.0, %v1992
  %v1994 = vsel %vm1971, %v1992, %v1993
  %v1995 = vadd.f32 %v1994, 1.0
  %v1996 = vmul.f32 %v1969, %v1995
  %v1997 = vpack.c.bf16 %v1996, %v1996
  %v1998 = vld [vmem:[%s12] sm:$0xf]
  %v1999 = vld [vmem:[%s12 + $0x4] sm:$0xf]
  %v2000 = vld [vmem:[%s12 + $0x8] sm:$0xf]
  %v2001 = vld [vmem:[%s12 + $0xc] sm:$0xf]
  %v2002 = vld [vmem:[%s12 + $0x10] sm:$0xf]
  %v2003 = vld [vmem:[%s12 + $0x14] sm:$0xf]
  %v2004 = vld [vmem:[%s12 + $0x18] sm:$0xf]
  %v2005 = vld [vmem:[%s12 + $0x1c] sm:$0xf]
  %v2006 = vld [vmem:[%s13] sm:$0x1]
  %v2008 = vlaneseq
  %v2009 = vshrl.u32 %v2008, 7
  %v2010 = vsub.s32 0, %v2009
  %v2011 = vrot.slane %v2006, %v2010
  %v2021 = vunpack.c.l.b16 %v1998
  %v2022 = vunpack.c.l.b16 %v1999
  %v2023 = vunpack.c.l.b16 %v2000
  %v2024 = vunpack.c.l.b16 %v2001
  %v2025 = vunpack.c.l.b16 %v2002
  %v2026 = vunpack.c.l.b16 %v2003
  %v2027 = vunpack.c.l.b16 %v2004
  %v2028 = vunpack.c.l.b16 %v2005
  %v2029 = vpack.c.b16 %v2022, %v2021
  %v2030 = vpack.c.b16 %v2024, %v2023
  %v2031 = vpack.c.b16 %v2026, %v2025
  %v2032 = vpack.c.b16 %v2028, %v2027
  %v2038 = vsel %vm1925, %v1997, 0
  %2040 = vmatprep.subr.bf16.mxu0 0
  %2041 = vmatpush1.bf16.msra.mxu0 %v2029
  %2042 = vmatprep.subr.bf16.mxu0 0
  %2043 = vmatpush1.bf16.msra.mxu0 %v2030
  %2044 = vmatprep.subr.bf16.mxu0 0
  %2045 = vmatpush1.bf16.msra.mxu0 %v2031
  %2046 = vmatprep.subr.bf16.mxu0 0
  %2047 = vmatpush1.bf16.msra.mxu0 %v2032
  %2048 = vmatprep.subr.bf16.mxu0 0
  %2049 = vmatpush1.bf16.msra.mxu0 0
  %2050 = vmatprep.subr.bf16.mxu0 0
  %2051 = vmatpush1.bf16.msra.mxu0 0
  %2052 = vmatprep.subr.bf16.mxu0 0
  %2053 = vmatpush1.bf16.msra.mxu0 0
  %2054 = vmatprep.subr.bf16.mxu0 0
  %2055 = vmatpush1.bf16.msra.mxu0 0
  %2056 = vmatprep.subr.bf16.mxu0 0
  %2057 = vmatpush1.bf16.msra.mxu0 0
  %2058 = vmatprep.subr.bf16.mxu0 0
  %2059 = vmatpush1.bf16.msra.mxu0 0
  %2060 = vmatprep.subr.bf16.mxu0 0
  %2061 = vmatpush1.bf16.msra.mxu0 0
  %2062 = vmatprep.subr.bf16.mxu0 0
  %2063 = vmatpush1.bf16.msra.mxu0 0
  %2064 = vmatprep.subr.bf16.mxu0 0
  %2065 = vmatpush1.bf16.msra.mxu0 0
  %2066 = vmatprep.subr.bf16.mxu0 0
  %2067 = vmatpush1.bf16.msra.mxu0 0
  %2068 = vmatprep.subr.bf16.mxu0 0
  %2069 = vmatpush1.bf16.msra.mxu0 0
  %2070 = vmatprep.subr.bf16.mxu0 0
  %2071 = vmatpush1.bf16.msra.mxu0 0
  %2072 = vmatprep.mubr.bf16.mxu0 0
  %2073 = vmatmul.mubr.bf16.gmra.mrb[0].mxu0 %v2038
  %v2074 = vpop.f32.mrb[0].mxu0
  %v2075 = vadd.f32 %v2011, %v2074
  %v2076 = vpop.f32.mrb[0].mxu0
  %v2077 = vpop.f32.mrb[0].mxu0
  %v2078 = vpop.f32.mrb[0].mxu0
  %2079 = vdwg.mxu0
  %v2080 = vmul.f32 %v2075, 0.5
  %v2081 = vmul.f32 %v2075, 0.70710677
  %vm2082 = vcmp.ge.f32.partialorder %v2081, 0.0
  %v2083 = vsub.f32 0.0, %v2081
  %v2084 = vsel %vm2082, %v2081, %v2083
  %v2085 = vmul.f32 %v2084, 0.3275911
  %v2086 = vadd.f32 %v2085, 1.0
  %v2087 = vrcp.pop %v2086
  %v2088 = vmul.f32 1.0, %v2087
  %v2089 = vmul.f32 %v2088, 1.0614054
  %v2090 = vadd.f32 %v2089, -1.4531521
  %v2091 = vmul.f32 %v2088, %v2090
  %v2092 = vadd.f32 %v2091, 1.4214138
  %v2093 = vmul.f32 %v2088, %v2092
  %v2094 = vadd.f32 %v2093, -0.28449672
  %v2095 = vmul.f32 %v2088, %v2094
  %v2096 = vadd.f32 %v2095, 0.2548296
  %v2097 = vmul.f32 %v2088, %v2096
  %v2098 = vsub.f32 0.0, %v2084
  %v2099 = vmul.f32 %v2098, %v2084
  %v2100 = vmul.f32 %v2099, 1.442695
  %v2101 = vpow.pop %v2100
  %v2102 = vmul.f32 %v2097, %v2101
  %v2103 = vsub.f32 1.0, %v2102
  %v2104 = vsub.f32 0.0, %v2103
  %v2105 = vsel %vm2082, %v2103, %v2104
  %v2106 = vadd.f32 %v2105, 1.0
  %v2107 = vmul.f32 %v2080, %v2106
  %v2108 = vpack.c.bf16 %v2107, %v2107
  %v2109 = vld [vmem:[%s14] sm:$0xf]
  %v2110 = vld [vmem:[%s14 + $0x4] sm:$0xf]
  %v2111 = vld [vmem:[%s14 + $0x8] sm:$0xf]
  %v2112 = vld [vmem:[%s14 + $0xc] sm:$0xf]
  %v2113 = vld [vmem:[%s15] sm:$0x1]
  %v2115 = vlaneseq
  %v2116 = vshrl.u32 %v2115, 7
  %v2117 = vsub.s32 0, %v2116
  %v2118 = vrot.slane %v2113, %v2117
  %v2124 = vunpack.c.l.b16 %v2109
  %v2125 = vunpack.c.l.b16 %v2110
  %v2126 = vunpack.c.l.b16 %v2111
  %v2127 = vunpack.c.l.b16 %v2112
  %v2128 = vpack.c.b16 %v2125, %v2124
  %v2129 = vpack.c.b16 %v2127, %v2126
  %v2133 = vsel %vm1813, %v2108, 0
  %2135 = vmatprep.subr.bf16.mxu0 0
  %2136 = vmatpush1.bf16.msra.mxu0 %v2128
  %2137 = vmatprep.subr.bf16.mxu0 0
  %2138 = vmatpush1.bf16.msra.mxu0 %v2129
  %2139 = vmatprep.subr.bf16.mxu0 0
  %2140 = vmatpush1.bf16.msra.mxu0 0
  %2141 = vmatprep.subr.bf16.mxu0 0
  %2142 = vmatpush1.bf16.msra.mxu0 0
  %2143 = vmatprep.subr.bf16.mxu0 0
  %2144 = vmatpush1.bf16.msra.mxu0 0
  %2145 = vmatprep.subr.bf16.mxu0 0
  %2146 = vmatpush1.bf16.msra.mxu0 0
  %2147 = vmatprep.subr.bf16.mxu0 0
  %2148 = vmatpush1.bf16.msra.mxu0 0
  %2149 = vmatprep.subr.bf16.mxu0 0
  %2150 = vmatpush1.bf16.msra.mxu0 0
  %2151 = vmatprep.subr.bf16.mxu0 0
  %2152 = vmatpush1.bf16.msra.mxu0 0
  %2153 = vmatprep.subr.bf16.mxu0 0
  %2154 = vmatpush1.bf16.msra.mxu0 0
  %2155 = vmatprep.subr.bf16.mxu0 0
  %2156 = vmatpush1.bf16.msra.mxu0 0
  %2157 = vmatprep.subr.bf16.mxu0 0
  %2158 = vmatpush1.bf16.msra.mxu0 0
  %2159 = vmatprep.subr.bf16.mxu0 0
  %2160 = vmatpush1.bf16.msra.mxu0 0
  %2161 = vmatprep.subr.bf16.mxu0 0
  %2162 = vmatpush1.bf16.msra.mxu0 0
  %2163 = vmatprep.subr.bf16.mxu0 0
  %2164 = vmatpush1.bf16.msra.mxu0 0
  %2165 = vmatprep.subr.bf16.mxu0 0
  %2166 = vmatpush1.bf16.msra.mxu0 0
  %2167 = vmatprep.mubr.bf16.mxu0 0
  %2168 = vmatmul.mubr.bf16.gmra.mrb[0].mxu0 %v2133
  %v2169 = vpop.f32.mrb[0].mxu0
  %v2170 = vadd.f32 %v2118, %v2169
  %v2171 = vpop.f32.mrb[0].mxu0
  %v2172 = vpop.f32.mrb[0].mxu0
  %v2173 = vpop.f32.mrb[0].mxu0
  %2174 = vdwg.mxu0
  %v2175 = vld [vmem:[%s4] sm:$0x1]
  %v2177 = vlaneseq
  %v2178 = vshrl.u32 %v2177, 7
  %v2179 = vsub.s32 0, %v2178
  %v2180 = vrot.slane %v2175, %v2179
  %v2182 = vadd.f32 %v1590, %v2180
  %v2183 = vadd.f32 %v2182, %v2170
  %2184 = vxpose.xlu0.b32.start [1/16] %v2183, 128
  %2185 = vxpose.xlu0.b32.cont [2/16] 0.0, 128
  %2186 = vxpose.xlu0.b32.cont [3/16] 0.0, 128
  %2187 = vxpose.xlu0.b32.cont [4/16] 0.0, 128
  %2188 = vxpose.xlu0.b32.cont [5/16] 0.0, 128
  %2189 = vxpose.xlu0.b32.cont [6/16] 0.0, 128
  %2190 = vxpose.xlu0.b32.cont [7/16] 0.0, 128
  %2191 = vxpose.xlu0.b32.cont [8/16] 0.0, 128
  %2192 = vxpose.xlu0.b32.cont [9/16] 0.0, 128
  %2193 = vxpose.xlu0.b32.cont [10/16] 0.0, 128
  %2194 = vxpose.xlu0.b32.cont [11/16] 0.0, 128
  %2195 = vxpose.xlu0.b32.cont [12/16] 0.0, 128
  %2196 = vxpose.xlu0.b32.cont [13/16] 0.0, 128
  %2197 = vxpose.xlu0.b32.cont [14/16] 0.0, 128
  %2198 = vxpose.xlu0.b32.cont [15/16] 0.0, 128
  %2199 = vxpose.xlu0.b32.end [16/16] 0.0, 128
  %v2200 = vpop.trf.xlu0
  %v2201 = vpop.trf.xlu0
  %v2202 = vpop.trf.xlu0
  %v2203 = vpop.trf.xlu0
  %v2204 = vpop.trf.xlu0
  %v2205 = vpop.trf.xlu0
  %v2206 = vpop.trf.xlu0
  %v2207 = vpop.trf.xlu0
  %v2208 = vpop.trf.xlu0
  %v2209 = vpop.trf.xlu0
  %v2210 = vpop.trf.xlu0
  %v2211 = vpop.trf.xlu0
  %v2212 = vpop.trf.xlu0
  %v2213 = vpop.trf.xlu0
  %v2214 = vpop.trf.xlu0
  %v2215 = vpop.trf.xlu0
  %vm2216 = vcmask 64512
  %2217 = vst.msk [vmem:[%s16] sm:$0xff] %vm2216, %v2200
  %2218 = vst.msk [vmem:[%s16 + $0x8] sm:$0xff] %vm2216, %v2201
  // Predicated region
  $region66: #{tpu_custom_call.1} parent=0 // pred_check
    _
  $region67: #{tpu_custom_call.1} parent=0 // pred_check_branch
    %2220 = sbr.rel (0) target = $region69
  $region68: #{tpu_custom_call.1} parent=0 // pred_region
    _
  $region69: #{tpu_custom_call.1} parent=0 // pred_fallthru
    _
  // Predicated region
  $region70: #{tpu_custom_call.1} parent=0 // pred_check
    _
  $region71: #{tpu_custom_call.1} parent=0 // pred_check_branch
    %2222 = sbr.rel (0) target = $region73
  $region72: #{tpu_custom_call.1} parent=0 // pred_region
    _
  $region73: #{tpu_custom_call.1} parent=0 // pred_fallthru
    _

</llo_original>
